<compile_context>
chip_gen: v6e
topology: v6e:2x2x1
jax: 0.10.0
libtpu: 0.0.40
codegen_flags: <defaults>
</compile_context>

<pallas_src>
import jax
import jax.numpy as jnp
from jax.experimental import pallas as pl
from jax.experimental.pallas import tpu as pltpu

HIDDEN = 32          # latent size fed to the decoder
BATCH = 8            # small batch; whole problem lives in VMEM (no grid)
EPS = 1e-5
NEG_SLOPE = 0.1

# natural (unpadded) feature widths per layer
DIMS = (128, 196, 392, 784)

# ----------------------------------------------------------------------------
# Packing layout for the seven small per-feature vectors
#   order: g1, be1, g2, be2, g3, be3, b4
#   each segment starts at a 128-aligned lane offset -> static, copy-free slices
# ----------------------------------------------------------------------------
_VEC_WIDTHS = (128, 128, 196, 196, 392, 392, 784)


def _aligned_offsets(widths, align=128):
    offs, cur = [], 0
    for w in widths:
        offs.append(cur)
        cur += -(-w // align) * align
    return tuple(offs), cur


_VEC_OFFSETS, _VEC_TOTAL = _aligned_offsets(_VEC_WIDTHS)   # (0,128,256,512,768,1280,1792), 2688


def _decoder_kernel(x_ref, w1_ref, w2_ref, w3_ref, w4_ref, vec_ref, out_ref):
    """Whole decoder MLP for one (small) batch, entirely in VMEM."""

    def bn_lrelu(h, gamma, beta):
        # Training-mode BatchNorm1d (biased batch var) folded to scale/shift,
        # followed by LeakyReLU(0.1).  All in f32.
        mean = jnp.mean(h, axis=0, keepdims=True)
        c = h - mean
        var = jnp.mean(c * c, axis=0, keepdims=True)
        scale = gamma * jax.lax.rsqrt(var + EPS)      # EUP rsqrt — free slot
        shift = beta - mean * scale
        h = h * scale + shift
        return jnp.where(h > 0, h, NEG_SLOPE * h)

    # Static, 128-aligned slices of the packed vector operand (no copies).
    (o_g1, o_be1, o_g2, o_be2, o_g3, o_be3, o_b4) = _VEC_OFFSETS
    g1 = vec_ref[:, o_g1:o_g1 + DIMS[0]]
    be1 = vec_ref[:, o_be1:o_be1 + DIMS[0]]
    g2 = vec_ref[:, o_g2:o_g2 + DIMS[1]]
    be2 = vec_ref[:, o_be2:o_be2 + DIMS[1]]
    g3 = vec_ref[:, o_g3:o_g3 + DIMS[2]]
    be3 = vec_ref[:, o_be3:o_be3 + DIMS[2]]
    b4 = vec_ref[:, o_b4:o_b4 + DIMS[3]]

    bf16 = jnp.bfloat16
    x = x_ref[...]

    # Pre-BN Linear biases omitted on purpose: exactly cancelled by BN mean.
    h = jnp.dot(x.astype(bf16), w1_ref[...], preferred_element_type=jnp.float32)
    h = bn_lrelu(h, g1, be1)

    h = jnp.dot(h.astype(bf16), w2_ref[...], preferred_element_type=jnp.float32)
    h = bn_lrelu(h, g2, be2)

    h = jnp.dot(h.astype(bf16), w3_ref[...], preferred_element_type=jnp.float32)
    h = bn_lrelu(h, g3, be3)

    h = jnp.dot(h.astype(bf16), w4_ref[...], preferred_element_type=jnp.float32)
    out_ref[...] = jnp.tanh(h + b4)                   # f32 tanh (EUP)


# ----------------------------------------------------------------------------
# Parameter construction / packing
# ----------------------------------------------------------------------------

def init_params(key, hidden_size):
    """PyTorch-style init (f32, unpadded): Linear U(-1/sqrt(fan_in), +),
    BatchNorm gamma=1, beta=0.  Biases for layers 1-3 are created (for the
    faithful reference) even though the kernel provably does not need them."""
    sizes = [(hidden_size, DIMS[0]), (DIMS[0], DIMS[1]),
             (DIMS[1], DIMS[2]), (DIMS[2], DIMS[3])]
    lin = []
    for fan_in, fan_out in sizes:
        key, kw, kb = jax.random.split(key, 3)
        bound = 1.0 / jnp.sqrt(jnp.float32(fan_in))
        w = jax.random.uniform(kw, (fan_in, fan_out), jnp.float32, -bound, bound)
        b = jax.random.uniform(kb, (1, fan_out), jnp.float32, -bound, bound)
        lin.append((w, b))
    bn = [(jnp.ones((1, n), jnp.float32), jnp.zeros((1, n), jnp.float32))
          for n in DIMS[:3]]
    return lin, bn


def pack_kernel_params(lin_params, bn_params):
    """bf16 weights at natural (unpadded) sizes + one packed f32 array holding
    all small per-feature vectors at 128-aligned offsets (fewer input DMAs)."""
    (w1, _b1), (w2, _b2), (w3, _b3), (w4, b4) = lin_params
    (g1, be1), (g2, be2), (g3, be3) = bn_params

    w1p = w1.astype(jnp.bfloat16)            # (32, 128)
    w2p = w2.astype(jnp.bfloat16)            # (128, 196)
    w3p = w3.astype(jnp.bfloat16)            # (196, 392)
    w4p = w4.astype(jnp.bfloat16)            # (392, 784)

    vec = jnp.zeros((1, _VEC_TOTAL), jnp.float32)
    for off, piece in zip(_VEC_OFFSETS, (g1, be1, g2, be2, g3, be3, b4)):
        vec = vec.at[:, off:off + piece.shape[1]].set(piece)

    return (w1p, w2p, w3p, w4p, vec)


# ----------------------------------------------------------------------------
# Pallas wrapper
# ----------------------------------------------------------------------------

def decoder_forward(x, kernel_params):
    """x: (B, hidden) f32 -> (mu, ones_like(mu)), mu shape (B, 1, 28, 28)."""
    operands = (x,) + tuple(kernel_params)
    vmem_spec = pl.BlockSpec(memory_space=pltpu.MemorySpace.VMEM)

    mu_flat = pl.pallas_call(
        _decoder_kernel,
        out_shape=jax.ShapeDtypeStruct((x.shape[0], DIMS[3]), jnp.float32),
        in_specs=[vmem_spec] * len(operands),
        out_specs=vmem_spec,
    )(*operands)

    mu = mu_flat.reshape(x.shape[0], 1, 28, 28)       # Stack(1, 28, 28)
    return mu, jnp.ones_like(mu)


# ----------------------------------------------------------------------------
# References
# ----------------------------------------------------------------------------

def _reference_forward_f32(x, lin_params, bn_params):
    """Pure-JAX f32 reference mirroring PyTorch training-mode semantics
    exactly (including the pre-BN biases)."""
    h = x
    for i, (w, b) in enumerate(lin_params):
        h = h @ w + b
        if i < 3:
            g, be = bn_params[i]
            mean = jnp.mean(h, axis=0, keepdims=True)
            var = jnp.mean((h - mean) ** 2, axis=0, keepdims=True)
            h = (h - mean) / jnp.sqrt(var + EPS) * g + be
            h = jnp.where(h > 0, h, NEG_SLOPE * h)
    mu = jnp.tanh(h).reshape(x.shape[0], 1, 28, 28)
    return mu, jnp.ones_like(mu)


def _reference_forward_bf16(x, lin_params, bn_params):
    """Pure-JAX reference mirroring the kernel's exact arithmetic (bf16
    matmul operands, f32 accumulation/BN, dead biases dropped)."""
    bf16 = jnp.bfloat16
    (w1, _), (w2, _), (w3, _), (w4, b4) = lin_params

    def bn_lrelu(h, g, be):
        mean = jnp.mean(h, axis=0, keepdims=True)
        c = h - mean
        var = jnp.mean(c * c, axis=0, keepdims=True)
        scale = g * jax.lax.rsqrt(var + EPS)
        shift = be - mean * scale
        h = h * scale + shift
        return jnp.where(h > 0, h, NEG_SLOPE * h)

    h = jnp.dot(x.astype(bf16), w1.astype(bf16), preferred_element_type=jnp.float32)
    h = bn_lrelu(h, *bn_params[0])
    h = jnp.dot(h.astype(bf16), w2.astype(bf16), preferred_element_type=jnp.float32)
    h = bn_lrelu(h, *bn_params[1])
    h = jnp.dot(h.astype(bf16), w3.astype(bf16), preferred_element_type=jnp.float32)
    h = bn_lrelu(h, *bn_params[2])
    h = jnp.dot(h.astype(bf16), w4.astype(bf16), preferred_element_type=jnp.float32) + b4
    return jnp.tanh(h).reshape(x.shape[0], 1, 28, 28)


if __name__ == "__main__":
    key = jax.random.PRNGKey(0)
    key, kx, kp = jax.random.split(key, 3)

    x = jax.random.normal(kx, (BATCH, HIDDEN), jnp.float32)
    lin_params, bn_params = init_params(kp, HIDDEN)
    kernel_params = pack_kernel_params(lin_params, bn_params)

    mu, logvar = decoder_forward(x, kernel_params)
    jax.block_until_ready((mu, logvar))

    # Tight check vs. a reference doing the same (bf16-weight) arithmetic.
    mu_bf16_ref = _reference_forward_bf16(x, lin_params, bn_params)
    # Coarse check vs. the exact f32 PyTorch-semantics reference (bf16 weights
    # introduce ~1e-2 level deviations; tanh output is bounded in [-1, 1]).
    mu_f32_ref, logvar_ref = _reference_forward_f32(x, lin_params, bn_params)

    assert mu.shape == (BATCH, 1, 28, 28) and logvar.shape == (BATCH, 1, 28, 28)
    assert jnp.allclose(mu, mu_bf16_ref, atol=1e-3, rtol=1e-3)
    assert jnp.allclose(mu, mu_f32_ref, atol=1e-1)
    assert jnp.all(logvar == 1.0)

    print("KERNEL_OK")
</pallas_src>

<mosaic_0001>
module attributes {stable_mosaic.version = 11 : i64} {
  func.func @_decoder_kernel(%arg0: memref<8x32xf32, #tpu.memory_space<vmem>>, %arg1: memref<32x128xbf16, #tpu.memory_space<vmem>>, %arg2: memref<128x196xbf16, #tpu.memory_space<vmem>>, %arg3: memref<196x392xbf16, #tpu.memory_space<vmem>>, %arg4: memref<392x784xbf16, #tpu.memory_space<vmem>>, %arg5: memref<1x2688xf32, #tpu.memory_space<vmem>>, %arg6: memref<8x784xf32, #tpu.memory_space<vmem>>) attributes {dimension_semantics = [], scalar_prefetch = 0 : i64, scratch_operands = 0 : i64, tpu.core_type = #tpu.core_type<tc>} {
    %c0 = arith.constant 0 : index
    %c0_0 = arith.constant 0 : index
    %0 = vector.load %arg5[%c0, %c0_0] : memref<1x2688xf32, #tpu.memory_space<vmem>>, vector<1x128xf32>
    %c0_1 = arith.constant 0 : index
    %c128 = arith.constant 128 : index
    %1 = vector.load %arg5[%c0_1, %c128] : memref<1x2688xf32, #tpu.memory_space<vmem>>, vector<1x128xf32>
    %c0_2 = arith.constant 0 : index
    %c256 = arith.constant 256 : index
    %2 = vector.load %arg5[%c0_2, %c256] : memref<1x2688xf32, #tpu.memory_space<vmem>>, vector<1x196xf32>
    %c0_3 = arith.constant 0 : index
    %c512 = arith.constant 512 : index
    %3 = vector.load %arg5[%c0_3, %c512] : memref<1x2688xf32, #tpu.memory_space<vmem>>, vector<1x196xf32>
    %c0_4 = arith.constant 0 : index
    %c768 = arith.constant 768 : index
    %4 = vector.load %arg5[%c0_4, %c768] : memref<1x2688xf32, #tpu.memory_space<vmem>>, vector<1x392xf32>
    %c0_5 = arith.constant 0 : index
    %c1280 = arith.constant 1280 : index
    %5 = vector.load %arg5[%c0_5, %c1280] : memref<1x2688xf32, #tpu.memory_space<vmem>>, vector<1x392xf32>
    %c0_6 = arith.constant 0 : index
    %c1792 = arith.constant 1792 : index
    %6 = vector.load %arg5[%c0_6, %c1792] : memref<1x2688xf32, #tpu.memory_space<vmem>>, vector<1x784xf32>
    %c0_7 = arith.constant 0 : index
    %c0_8 = arith.constant 0 : index
    %7 = vector.load %arg0[%c0_7, %c0_8] : memref<8x32xf32, #tpu.memory_space<vmem>>, vector<8x32xf32>
    %8 = arith.truncf %7 : vector<8x32xf32> to vector<8x32xbf16>
    %c0_9 = arith.constant 0 : index
    %c0_10 = arith.constant 0 : index
    %9 = vector.load %arg1[%c0_9, %c0_10] : memref<32x128xbf16, #tpu.memory_space<vmem>>, vector<32x128xbf16>
    %cst = arith.constant dense<0.000000e+00> : vector<8x128xf32>
    %10 = tpu.matmul %8, %9, %cst {dimension_numbers = #tpu.dot_dimension_numbers<[1], [0], [0], [1], [0, 0, 1, 1], [], []>} : vector<8x32xbf16>, vector<32x128xbf16>, vector<8x128xf32> -> vector<8x128xf32>
    %cst_11 = arith.constant dense<0.000000e+00> : vector<128xf32>
    %11 = vector.multi_reduction <add>, %10, %cst_11 [0] : vector<8x128xf32> to vector<128xf32>
    %12 = vector.shape_cast %11 : vector<128xf32> to vector<1x128xf32>
    %cst_12 = arith.constant 8.000000e+00 : f32
    %13 = vector.broadcast %cst_12 : f32 to vector<1x128xf32>
    %14 = arith.divf %12, %13 : vector<1x128xf32>
    %15 = vector.broadcast %14 : vector<1x128xf32> to vector<8x128xf32>
    %16 = arith.subf %10, %15 : vector<8x128xf32>
    %17 = arith.mulf %16, %16 : vector<8x128xf32>
    %cst_13 = arith.constant dense<0.000000e+00> : vector<128xf32>
    %18 = vector.multi_reduction <add>, %17, %cst_13 [0] : vector<8x128xf32> to vector<128xf32>
    %19 = vector.shape_cast %18 : vector<128xf32> to vector<1x128xf32>
    %cst_14 = arith.constant 8.000000e+00 : f32
    %20 = vector.broadcast %cst_14 : f32 to vector<1x128xf32>
    %21 = arith.divf %19, %20 : vector<1x128xf32>
    %cst_15 = arith.constant 9.99999974E-6 : f32
    %22 = vector.broadcast %cst_15 : f32 to vector<1x128xf32>
    %23 = arith.addf %21, %22 : vector<1x128xf32>
    %24 = math.rsqrt %23 : vector<1x128xf32>
    %25 = arith.mulf %0, %24 : vector<1x128xf32>
    %26 = arith.mulf %14, %25 : vector<1x128xf32>
    %27 = arith.subf %1, %26 : vector<1x128xf32>
    %28 = vector.broadcast %25 : vector<1x128xf32> to vector<8x128xf32>
    %29 = arith.mulf %10, %28 : vector<8x128xf32>
    %30 = vector.broadcast %27 : vector<1x128xf32> to vector<8x128xf32>
    %31 = arith.addf %29, %30 : vector<8x128xf32>
    %cst_16 = arith.constant 0.000000e+00 : f32
    %32 = vector.broadcast %cst_16 : f32 to vector<8x128xf32>
    %33 = arith.cmpf ogt, %31, %32 : vector<8x128xf32>
    %cst_17 = arith.constant 1.000000e-01 : f32
    %34 = vector.broadcast %cst_17 : f32 to vector<8x128xf32>
    %35 = arith.mulf %34, %31 : vector<8x128xf32>
    %36 = arith.select %33, %31, %35 : vector<8x128xi1>, vector<8x128xf32>
    %37 = arith.truncf %36 : vector<8x128xf32> to vector<8x128xbf16>
    %c0_18 = arith.constant 0 : index
    %c0_19 = arith.constant 0 : index
    %38 = vector.load %arg2[%c0_18, %c0_19] : memref<128x196xbf16, #tpu.memory_space<vmem>>, vector<128x196xbf16>
    %cst_20 = arith.constant dense<0.000000e+00> : vector<8x196xf32>
    %39 = tpu.matmul %37, %38, %cst_20 {dimension_numbers = #tpu.dot_dimension_numbers<[1], [0], [0], [1], [0, 0, 1, 1], [], []>} : vector<8x128xbf16>, vector<128x196xbf16>, vector<8x196xf32> -> vector<8x196xf32>
    %cst_21 = arith.constant dense<0.000000e+00> : vector<196xf32>
    %40 = vector.multi_reduction <add>, %39, %cst_21 [0] : vector<8x196xf32> to vector<196xf32>
    %41 = vector.shape_cast %40 : vector<196xf32> to vector<1x196xf32>
    %cst_22 = arith.constant 8.000000e+00 : f32
    %42 = vector.broadcast %cst_22 : f32 to vector<1x196xf32>
    %43 = arith.divf %41, %42 : vector<1x196xf32>
    %44 = vector.broadcast %43 : vector<1x196xf32> to vector<8x196xf32>
    %45 = arith.subf %39, %44 : vector<8x196xf32>
    %46 = arith.mulf %45, %45 : vector<8x196xf32>
    %cst_23 = arith.constant dense<0.000000e+00> : vector<196xf32>
    %47 = vector.multi_reduction <add>, %46, %cst_23 [0] : vector<8x196xf32> to vector<196xf32>
    %48 = vector.shape_cast %47 : vector<196xf32> to vector<1x196xf32>
    %cst_24 = arith.constant 8.000000e+00 : f32
    %49 = vector.broadcast %cst_24 : f32 to vector<1x196xf32>
    %50 = arith.divf %48, %49 : vector<1x196xf32>
    %cst_25 = arith.constant 9.99999974E-6 : f32
    %51 = vector.broadcast %cst_25 : f32 to vector<1x196xf32>
    %52 = arith.addf %50, %51 : vector<1x196xf32>
    %53 = math.rsqrt %52 : vector<1x196xf32>
    %54 = arith.mulf %2, %53 : vector<1x196xf32>
    %55 = arith.mulf %43, %54 : vector<1x196xf32>
    %56 = arith.subf %3, %55 : vector<1x196xf32>
    %57 = vector.broadcast %54 : vector<1x196xf32> to vector<8x196xf32>
    %58 = arith.mulf %39, %57 : vector<8x196xf32>
    %59 = vector.broadcast %56 : vector<1x196xf32> to vector<8x196xf32>
    %60 = arith.addf %58, %59 : vector<8x196xf32>
    %cst_26 = arith.constant 0.000000e+00 : f32
    %61 = vector.broadcast %cst_26 : f32 to vector<8x196xf32>
    %62 = arith.cmpf ogt, %60, %61 : vector<8x196xf32>
    %cst_27 = arith.constant 1.000000e-01 : f32
    %63 = vector.broadcast %cst_27 : f32 to vector<8x196xf32>
    %64 = arith.mulf %63, %60 : vector<8x196xf32>
    %65 = arith.select %62, %60, %64 : vector<8x196xi1>, vector<8x196xf32>
    %66 = arith.truncf %65 : vector<8x196xf32> to vector<8x196xbf16>
    %c0_28 = arith.constant 0 : index
    %c0_29 = arith.constant 0 : index
    %67 = vector.load %arg3[%c0_28, %c0_29] : memref<196x392xbf16, #tpu.memory_space<vmem>>, vector<196x392xbf16>
    %cst_30 = arith.constant dense<0.000000e+00> : vector<8x392xf32>
    %68 = tpu.matmul %66, %67, %cst_30 {dimension_numbers = #tpu.dot_dimension_numbers<[1], [0], [0], [1], [0, 0, 1, 1], [], []>} : vector<8x196xbf16>, vector<196x392xbf16>, vector<8x392xf32> -> vector<8x392xf32>
    %cst_31 = arith.constant dense<0.000000e+00> : vector<392xf32>
    %69 = vector.multi_reduction <add>, %68, %cst_31 [0] : vector<8x392xf32> to vector<392xf32>
    %70 = vector.shape_cast %69 : vector<392xf32> to vector<1x392xf32>
    %cst_32 = arith.constant 8.000000e+00 : f32
    %71 = vector.broadcast %cst_32 : f32 to vector<1x392xf32>
    %72 = arith.divf %70, %71 : vector<1x392xf32>
    %73 = vector.broadcast %72 : vector<1x392xf32> to vector<8x392xf32>
    %74 = arith.subf %68, %73 : vector<8x392xf32>
    %75 = arith.mulf %74, %74 : vector<8x392xf32>
    %cst_33 = arith.constant dense<0.000000e+00> : vector<392xf32>
    %76 = vector.multi_reduction <add>, %75, %cst_33 [0] : vector<8x392xf32> to vector<392xf32>
    %77 = vector.shape_cast %76 : vector<392xf32> to vector<1x392xf32>
    %cst_34 = arith.constant 8.000000e+00 : f32
    %78 = vector.broadcast %cst_34 : f32 to vector<1x392xf32>
    %79 = arith.divf %77, %78 : vector<1x392xf32>
    %cst_35 = arith.constant 9.99999974E-6 : f32
    %80 = vector.broadcast %cst_35 : f32 to vector<1x392xf32>
    %81 = arith.addf %79, %80 : vector<1x392xf32>
    %82 = math.rsqrt %81 : vector<1x392xf32>
    %83 = arith.mulf %4, %82 : vector<1x392xf32>
    %84 = arith.mulf %72, %83 : vector<1x392xf32>
    %85 = arith.subf %5, %84 : vector<1x392xf32>
    %86 = vector.broadcast %83 : vector<1x392xf32> to vector<8x392xf32>
    %87 = arith.mulf %68, %86 : vector<8x392xf32>
    %88 = vector.broadcast %85 : vector<1x392xf32> to vector<8x392xf32>
    %89 = arith.addf %87, %88 : vector<8x392xf32>
    %cst_36 = arith.constant 0.000000e+00 : f32
    %90 = vector.broadcast %cst_36 : f32 to vector<8x392xf32>
    %91 = arith.cmpf ogt, %89, %90 : vector<8x392xf32>
    %cst_37 = arith.constant 1.000000e-01 : f32
    %92 = vector.broadcast %cst_37 : f32 to vector<8x392xf32>
    %93 = arith.mulf %92, %89 : vector<8x392xf32>
    %94 = arith.select %91, %89, %93 : vector<8x392xi1>, vector<8x392xf32>
    %95 = arith.truncf %94 : vector<8x392xf32> to vector<8x392xbf16>
    %c0_38 = arith.constant 0 : index
    %c0_39 = arith.constant 0 : index
    %96 = vector.load %arg4[%c0_38, %c0_39] : memref<392x784xbf16, #tpu.memory_space<vmem>>, vector<392x784xbf16>
    %cst_40 = arith.constant dense<0.000000e+00> : vector<8x784xf32>
    %97 = tpu.matmul %95, %96, %cst_40 {dimension_numbers = #tpu.dot_dimension_numbers<[1], [0], [0], [1], [0, 0, 1, 1], [], []>} : vector<8x392xbf16>, vector<392x784xbf16>, vector<8x784xf32> -> vector<8x784xf32>
    %98 = vector.broadcast %6 : vector<1x784xf32> to vector<8x784xf32>
    %99 = arith.addf %97, %98 : vector<8x784xf32>
    %100 = math.tanh %99 : vector<8x784xf32>
    %c0_41 = arith.constant 0 : index
    %c0_42 = arith.constant 0 : index
    %101 = vector.load %arg6[%c0_41, %c0_42] : memref<8x784xf32, #tpu.memory_space<vmem>>, vector<8x784xf32>
    tpu.vector_store %arg6[%c0_41, %c0_42], %100 {strides = array<i32>} : memref<8x784xf32, #tpu.memory_space<vmem>>, vector<8x784xf32>,
    return
  }
}

</mosaic_0001>

<llo_original>
// kernel: tpu_custom_call.1
$region0: #{tpu_custom_call.1}
  #allocation0 [shape = 'u32[]', space=smem, size = 0x4, offset = 0x4, fixed_abs, tag = 'smem constant byte address 0x4 - core index']
  #allocation1 [shape = 'u32[144,128]{1,0:T(1,128)}', space=vmem, size = 0x12000, scoped, tag = 'internal scratch']
  %s0 = inlined_call_operand.vmem [shape: f32[8,32], index: 0, kind: input, shape index: {}]
  %s1 = inlined_call_operand.vmem [shape: bf16[32,128], index: 1, kind: input, shape index: {}]
  %s2 = inlined_call_operand.vmem [shape: bf16[128,196], index: 2, kind: input, shape index: {}]
  %s3 = inlined_call_operand.vmem [shape: bf16[196,392], index: 3, kind: input, shape index: {}]
  %s4 = inlined_call_operand.hbm [shape: bf16[392,784], index: 4, kind: input, shape index: {}]
  %s5 = inlined_call_operand.vmem [shape: f32[1,2688], index: 5, kind: input, shape index: {}]
  %s6 = inlined_call_operand.hbm [shape: f32[8,784], index: 6, kind: output, shape index: {}]
  %s7 = sld [smem:[#allocation0]]
  $region38: #{tpu_custom_call.1} parent=0
    _
  %s9 = ssub.s32 1, %s7
  %s10 = scalar_select 0, %s9, %s7
  $region1: #{tpu_custom_call.1} parent=0
    #allocation2 [shape = 'u8[702464]{0}', space=vmem, size = 0xab800, scoped, tag = 'input window, operand 4, single buffered']
    #allocation3 [shape = 's32[1]{0}', space=sflag, size = 0x4, scoped, tag = 'scoped memory for tpu_custom_call.1']
    #allocation4 [shape = 's32[1]{0}', space=sflag, size = 0x4, scoped, tag = 'scoped memory for tpu_custom_call.1']
    #allocation5 [shape = 'u8[28672]{0}', space=vmem, size = 0x7000, scoped, tag = 'output window, operand 0, single buffered']
    %11 = vsyncpa [#allocation3], 0
    %12 = vsyncpa [#allocation4], 0
    // Predicated region
    $region2: #{tpu_custom_call.1} parent=1 // pred_check
      _
    $region3: #{tpu_custom_call.1} parent=1 // pred_check_branch
      %14 = sbr.rel (0) target = $region5
    $region4: #{tpu_custom_call.1} parent=1 // pred_region
      _
    $region5: #{tpu_custom_call.1} parent=1 // pred_fallthru
      _
    // Predicated region
    $region6: #{tpu_custom_call.1} parent=1 // pred_check
      _
    $region7: #{tpu_custom_call.1} parent=1 // pred_check_branch
      %16 = sbr.rel (0) target = $region9
    $region8: #{tpu_custom_call.1} parent=1 // pred_region
      _
    $region9: #{tpu_custom_call.1} parent=1 // pred_fallthru
      _
    // Predicated region
    $region10: #{tpu_custom_call.1} parent=1 // pred_check
      _
    $region11: #{tpu_custom_call.1} parent=1 // pred_check_branch
      %18 = sbr.rel (0) target = $region13
    $region12: #{tpu_custom_call.1} parent=1 // pred_region
      _
    $region13: #{tpu_custom_call.1} parent=1 // pred_fallthru
      _
    // Predicated region
    $region14: #{tpu_custom_call.1} parent=1 // pred_check
      _
    $region15: #{tpu_custom_call.1} parent=1 // pred_check_branch
      %20 = sbr.rel (0) target = $region17
    $region16: #{tpu_custom_call.1} parent=1 // pred_region
      _
    $region17: #{tpu_custom_call.1} parent=1 // pred_fallthru
      _
    // Predicated region
    $region18: #{tpu_custom_call.1} parent=1 // pred_check
      _
    $region19: #{tpu_custom_call.1} parent=1 // pred_check_branch
      %22 = sbr.rel (0) target = $region21
    $region20: #{tpu_custom_call.1} parent=1 // pred_region
      %s24 = ssub.s32 21952, 21952
      %25 = vsyncadd [#allocation3], %s24
      %s26 = sshll.u32 [#allocation2], 4
      %s27 = int_to_ptr.vmem [resolvable:$true] %s26
      %32 = dma.hbm_to_vmem [thread:$0]  %s4, 21952, %s27, [#allocation3], 448, 448, 28
    $region21: #{tpu_custom_call.1} parent=1 // pred_fallthru
      _
    // Predicated region
    $region22: #{tpu_custom_call.1} parent=1 // pred_check
      _
    $region23: #{tpu_custom_call.1} parent=1 // pred_check_branch
      %34 = sbr.rel (0) target = $region25
    $region24: #{tpu_custom_call.1} parent=1 // pred_region
      _
    $region25: #{tpu_custom_call.1} parent=1 // pred_fallthru
      _
    // Predicated region
    $region26: #{tpu_custom_call.1} parent=1 // pred_check
      _
    $region27: #{tpu_custom_call.1} parent=1 // pred_check_branch
      %36 = sbr.rel (0) target = $region29
    $region28: #{tpu_custom_call.1} parent=1 // pred_region
      %37 = dma.done [#allocation3], 21952
    $region29: #{tpu_custom_call.1} parent=1 // pred_fallthru
      _
    %v39 = vld [vmem:[%s5] sm:$0x1]
    %v40 = vld [vmem:[%s5 + $0x1] sm:$0x1]
    %v41 = vld [vmem:[%s5 + $0x2] sm:$0x3]
    %v42 = vld [vmem:[%s5 + $0x4] sm:$0x3]
    %v43 = vld [vmem:[%s5 + $0x6] sm:$0xf]
    %v44 = vld [vmem:[%s5 + $0xa] sm:$0xf]
    %v45 = vld [vmem:[%s5 + $0xe] sm:$0x7f]
    %v46 = vld [vmem:[%s0] sm:$0xff]
    %v47 = vpack.c.bf16 %v46, %v46
    %v48 = vld [vmem:[%s1] sm:$0xf]
    %v49 = vld [vmem:[%s1 + $0x4] sm:$0xf]
    %v50 = vld [vmem:[%s1 + $0x8] sm:$0xf]
    %v51 = vld [vmem:[%s1 + $0xc] sm:$0xf]
    %v56 = vunpack.c.l.b16 %v48
    %v57 = vunpack.c.l.b16 %v49
    %v58 = vunpack.c.l.b16 %v50
    %v59 = vunpack.c.l.b16 %v51
    %v60 = vpack.c.b16 %v57, %v56
    %v61 = vpack.c.b16 %v59, %v58
    %vm64 = vcmask 261120
    %v66 = vsel %vm64, %v47, 0
    %68 = vmatprep.subr.bf16.mxu0 0
    %69 = vmatpush1.bf16.msra.mxu0 0
    %70 = vmatprep.subr.bf16.mxu0 0
    %71 = vmatpush1.bf16.msra.mxu0 0
    %72 = vmatprep.subr.bf16.mxu0 0
    %73 = vmatpush1.bf16.msra.mxu0 0
    %74 = vmatprep.subr.bf16.mxu0 0
    %75 = vmatpush1.bf16.msra.mxu0 0
    %76 = vmatprep.subr.bf16.mxu0 0
    %77 = vmatpush1.bf16.msra.mxu0 0
    %78 = vmatprep.subr.bf16.mxu0 0
    %79 = vmatpush1.bf16.msra.mxu0 0
    %80 = vmatprep.subr.bf16.mxu0 0
    %81 = vmatpush1.bf16.msra.mxu0 %v61
    %82 = vmatprep.subr.bf16.mxu0 0
    %83 = vmatpush1.bf16.msra.mxu0 %v60
    %84 = vmatprep.subr.bf16.mxu0 0
    %85 = vmatpush2.bf16.msra.mxu0 0
    %86 = vmatprep.subr.bf16.mxu0 0
    %87 = vmatpush2.bf16.msra.mxu0 0
    %88 = vmatprep.subr.bf16.mxu0 0
    %89 = vmatpush2.bf16.msra.mxu0 0
    %90 = vmatprep.subr.bf16.mxu0 0
    %91 = vmatpush2.bf16.msra.mxu0 0
    %92 = vmatprep.subr.bf16.mxu0 0
    %93 = vmatpush2.bf16.msra.mxu0 0
    %94 = vmatprep.subr.bf16.mxu0 0
    %95 = vmatpush2.bf16.msra.mxu0 0
    %96 = vmatprep.subr.bf16.mxu0 0
    %97 = vmatpush2.bf16.msra.mxu0 0
    %98 = vmatprep.subr.bf16.mxu0 0
    %99 = vmatpush2.bf16.msra.mxu0 0
    %100 = vmatprep.mubr.bf16.mxu0 0
    %101 = vmatmul.mubr.bf16.gmra.mxu0 %v66
    %v102 = vpop.f32.mrf.mxu0
    %v103 = vadd.f32 0.0, %v102
    %v104 = vpop.f32.mrf.mxu0
    %v105 = vpop.f32.mrf.mxu0
    %v106 = vpop.f32.mrf.mxu0
    %107 = vdwg.mxu0
    %v108 = vrot.slane %v103, 4
    %v109 = vadd.f32 %v103, %v108
    %v110 = vrot.slane %v109, 2
    %v111 = vadd.f32 %v109, %v110
    %v112 = vrot.slane %v111, 1
    %v113 = vadd.f32 %v111, %v112
    %v114 = vrcp.pop 8.0
    %v115 = vmul.f32 %v113, %v114
    %v116 = vsub.f32 %v103, %v115
    %v117 = vmul.f32 %v116, %v116
    %v118 = vrot.slane %v117, 4
    %v119 = vadd.f32 %v117, %v118
    %v120 = vrot.slane %v119, 2
    %v121 = vadd.f32 %v119, %v120
    %v122 = vrot.slane %v121, 1
    %v123 = vadd.f32 %v121, %v122
    %v124 = vmul.f32 %v123, %v114
    %v125 = vadd.f32 %v124, 1e-05
    %v126 = vrsqrt.pop %v125
    %v127 = vmul.f32 %v39, %v126
    %v128 = vmul.f32 %v115, %v127
    %v129 = vsub.f32 %v40, %v128
    %v131 = vlaneseq
    %v132 = vshrl.u32 %v131, 7
    %v133 = vsub.s32 0, %v132
    %v134 = vrot.slane %v127, %v133
    %v136 = vmul.f32 %v103, %v134
    %v138 = vlaneseq
    %v139 = vshrl.u32 %v138, 7
    %v140 = vsub.s32 0, %v139
    %v141 = vrot.slane %v129, %v140
    %v143 = vadd.f32 %v136, %v141
    %vm144 = vcmp.gt.f32.partialorder %v143, 0.0
    %v145 = vmul.f32 %v143, 0.1
    %v146 = vsel %vm144, %v143, %v145
    %v147 = vpack.c.bf16 %v146, %v146
    %v148 = vld [vmem:[%s2] sm:$0xff]
    %v149 = vld [vmem:[%s2 + $0x8] sm:$0xff]
    %v150 = vld [vmem:[%s2 + $0x10] sm:$0xff]
    %v151 = vld [vmem:[%s2 + $0x18] sm:$0xff]
    %v152 = vld [vmem:[%s2 + $0x20] sm:$0xff]
    %v153 = vld [vmem:[%s2 + $0x28] sm:$0xff]
    %v154 = vld [vmem:[%s2 + $0x30] sm:$0xff]
    %v155 = vld [vmem:[%s2 + $0x38] sm:$0xff]
    %v156 = vld [vmem:[%s2 + $0x40] sm:$0xff]
    %v157 = vld [vmem:[%s2 + $0x48] sm:$0xff]
    %v158 = vld [vmem:[%s2 + $0x50] sm:$0xff]
    %v159 = vld [vmem:[%s2 + $0x58] sm:$0xff]
    %v160 = vld [vmem:[%s2 + $0x60] sm:$0xff]
    %v161 = vld [vmem:[%s2 + $0x68] sm:$0xff]
    %v162 = vld [vmem:[%s2 + $0x70] sm:$0xff]
    %v163 = vld [vmem:[%s2 + $0x78] sm:$0xff]
    %v180 = vunpack.c.l.b16 %v148
    %v181 = vunpack.c.h.b16 %v148
    %v182 = vunpack.c.l.b16 %v149
    %v183 = vunpack.c.h.b16 %v149
    %v184 = vunpack.c.l.b16 %v150
    %v185 = vunpack.c.h.b16 %v150
    %v186 = vunpack.c.l.b16 %v151
    %v187 = vunpack.c.h.b16 %v151
    %v188 = vunpack.c.l.b16 %v152
    %v189 = vunpack.c.h.b16 %v152
    %v190 = vunpack.c.l.b16 %v153
    %v191 = vunpack.c.h.b16 %v153
    %v192 = vunpack.c.l.b16 %v154
    %v193 = vunpack.c.h.b16 %v154
    %v194 = vunpack.c.l.b16 %v155
    %v195 = vunpack.c.h.b16 %v155
    %v196 = vunpack.c.l.b16 %v156
    %v197 = vunpack.c.h.b16 %v156
    %v198 = vunpack.c.l.b16 %v157
    %v199 = vunpack.c.h.b16 %v157
    %v200 = vunpack.c.l.b16 %v158
    %v201 = vunpack.c.h.b16 %v158
    %v202 = vunpack.c.l.b16 %v159
    %v203 = vunpack.c.h.b16 %v159
    %v204 = vunpack.c.l.b16 %v160
    %v205 = vunpack.c.h.b16 %v160
    %v206 = vunpack.c.l.b16 %v161
    %v207 = vunpack.c.h.b16 %v161
    %v208 = vunpack.c.l.b16 %v162
    %v209 = vunpack.c.h.b16 %v162
    %v210 = vunpack.c.l.b16 %v163
    %v211 = vunpack.c.h.b16 %v163
    %v212 = vpack.c.b16 %v182, %v180
    %v213 = vpack.c.b16 %v183, %v181
    %v214 = vpack.c.b16 %v186, %v184
    %v215 = vpack.c.b16 %v187, %v185
    %v216 = vpack.c.b16 %v190, %v188
    %v217 = vpack.c.b16 %v191, %v189
    %v218 = vpack.c.b16 %v194, %v192
    %v219 = vpack.c.b16 %v195, %v193
    %v220 = vpack.c.b16 %v198, %v196
    %v221 = vpack.c.b16 %v199, %v197
    %v222 = vpack.c.b16 %v202, %v200
    %v223 = vpack.c.b16 %v203, %v201
    %v224 = vpack.c.b16 %v206, %v204
    %v225 = vpack.c.b16 %v207, %v205
    %v226 = vpack.c.b16 %v210, %v208
    %v227 = vpack.c.b16 %v211, %v209
    %244 = vmatprep.subr.bf16.mxu0 %v227
    %245 = vmatpush1.bf16.msra.mxu0 %v226
    %246 = vmatprep.subr.bf16.mxu0 %v225
    %247 = vmatpush1.bf16.msra.mxu0 %v224
    %248 = vmatprep.subr.bf16.mxu0 %v223
    %249 = vmatpush1.bf16.msra.mxu0 %v222
    %250 = vmatprep.subr.bf16.mxu0 %v221
    %251 = vmatpush1.bf16.msra.mxu0 %v220
    %252 = vmatprep.subr.bf16.mxu0 %v219
    %253 = vmatpush1.bf16.msra.mxu0 %v218
    %254 = vmatprep.subr.bf16.mxu0 %v217
    %255 = vmatpush1.bf16.msra.mxu0 %v216
    %256 = vmatprep.subr.bf16.mxu0 %v215
    %257 = vmatpush1.bf16.msra.mxu0 %v214
    %258 = vmatprep.subr.bf16.mxu0 %v213
    %259 = vmatpush1.bf16.msra.mxu0 %v212
    %260 = vmatprep.subr.bf16.mxu0 0
    %261 = vmatpush2.bf16.msra.mxu0 0
    %262 = vmatprep.subr.bf16.mxu0 0
    %263 = vmatpush2.bf16.msra.mxu0 0
    %264 = vmatprep.subr.bf16.mxu0 0
    %265 = vmatpush2.bf16.msra.mxu0 0
    %266 = vmatprep.subr.bf16.mxu0 0
    %267 = vmatpush2.bf16.msra.mxu0 0
    %268 = vmatprep.subr.bf16.mxu0 0
    %269 = vmatpush2.bf16.msra.mxu0 0
    %270 = vmatprep.subr.bf16.mxu0 0
    %271 = vmatpush2.bf16.msra.mxu0 0
    %272 = vmatprep.subr.bf16.mxu0 0
    %273 = vmatpush2.bf16.msra.mxu0 0
    %274 = vmatprep.subr.bf16.mxu0 0
    %275 = vmatpush2.bf16.msra.mxu0 0
    %276 = vmatprep.mubr.bf16.mxu0 0
    %277 = vmatmul.mubr.bf16.gmra.mxu0 %v147
    %v278 = vpop.f32.mrf.mxu0
    %v279 = vadd.f32 0.0, %v278
    %v280 = vpop.f32.mrf.mxu0
    %v281 = vadd.f32 0.0, %v280
    %v282 = vpop.f32.mrf.mxu0
    %v283 = vpop.f32.mrf.mxu0
    %284 = vdwg.mxu0
    %v285 = vrot.slane %v279, 4
    %v286 = vadd.f32 %v279, %v285
    %v287 = vrot.slane %v286, 2
    %v288 = vadd.f32 %v286, %v287
    %v289 = vrot.slane %v288, 1
    %v290 = vadd.f32 %v288, %v289
    %vm291 = vcmask 556032
    %v292 = vsel %vm291, %v281, 0.0
    %v293 = vrot.slane %v292, 4
    %v294 = vadd.f32 %v292, %v293
    %v295 = vrot.slane %v294, 2
    %v296 = vadd.f32 %v294, %v295
    %v297 = vrot.slane %v296, 1
    %v298 = vadd.f32 %v296, %v297
    %v299 = vmul.f32 %v290, %v114
    %v300 = vmul.f32 %v298, %v114
    %v301 = vsub.f32 %v279, %v299
    %v302 = vsub.f32 %v281, %v300
    %v303 = vmul.f32 %v301, %v301
    %v304 = vmul.f32 %v302, %v302
    %v305 = vrot.slane %v303, 4
    %v306 = vadd.f32 %v303, %v305
    %v307 = vrot.slane %v306, 2
    %v308 = vadd.f32 %v306, %v307
    %v309 = vrot.slane %v308, 1
    %v310 = vadd.f32 %v308, %v309
    %v311 = vsel %vm291, %v304, 0.0
    %v312 = vrot.slane %v311, 4
    %v313 = vadd.f32 %v311, %v312
    %v314 = vrot.slane %v313, 2
    %v315 = vadd.f32 %v313, %v314
    %v316 = vrot.slane %v315, 1
    %v317 = vadd.f32 %v315, %v316
    %v318 = vmul.f32 %v310, %v114
    %v319 = vmul.f32 %v317, %v114
    %v320 = vadd.f32 %v318, 1e-05
    %v321 = vadd.f32 %v319, 1e-05
    %v322 = vrsqrt.pop %v320
    %v323 = vrsqrt.pop %v321
    %v326 = vcombine.low %v322, %v323
    %v328 = vunpack.c.l.s4 1966171168
    %v329 = vunpack.c.0.s8 %v328
    %v330 = vlaneseq
    %v331 = vshrl.u32 %v330, 7
    %v332 = vsub.s32 %v329, %v331
    %v333 = vrot.slane %v326, %v332
    %v335 = vunpack.c.l.s4 1966171168
    %v336 = vunpack.c.0.s8 %v335
    %v337 = vlaneseq
    %v338 = vshrl.u32 %v337, 7
    %v339 = vsub.s32 %v336, %v338
    %v340 = vrot.slane %v333, %v339
    %v342 = vmul.f32 %v41, %v340
    %v344 = vlaneseq
    %v345 = vshrl.u32 %v344, 7
    %v346 = vsub.s32 0, %v345
    %v347 = vrot.slane %v342, %v346
    %v348 = vlaneseq
    %v349 = vshrl.u32 %v348, 7
    %v350 = vsub.s32 1, %v349
    %v351 = vrot.slane %v342, %v350
    %v354 = vmul.f32 %v299, %v347
    %v355 = vmul.f32 %v300, %v351
    %v358 = vcombine.low %v354, %v355
    %v360 = vunpack.c.l.s4 1966171168
    %v361 = vunpack.c.0.s8 %v360
    %v362 = vlaneseq
    %v363 = vshrl.u32 %v362, 7
    %v364 = vsub.s32 %v361, %v363
    %v365 = vrot.slane %v358, %v364
    %v367 = vunpack.c.l.s4 1966171168
    %v368 = vunpack.c.0.s8 %v367
    %v369 = vlaneseq
    %v370 = vshrl.u32 %v369, 7
    %v371 = vsub.s32 %v368, %v370
    %v372 = vrot.slane %v365, %v371
    %v374 = vsub.f32 %v42, %v372
    %v375 = vmul.f32 %v279, %v347
    %v376 = vmul.f32 %v281, %v351
    %v378 = vlaneseq
    %v379 = vshrl.u32 %v378, 7
    %v380 = vsub.s32 0, %v379
    %v381 = vrot.slane %v374, %v380
    %v382 = vlaneseq
    %v383 = vshrl.u32 %v382, 7
    %v384 = vsub.s32 1, %v383
    %v385 = vrot.slane %v374, %v384
    %v388 = vadd.f32 %v375, %v381
    %v389 = vadd.f32 %v376, %v385
    %vm390 = vcmp.gt.f32.partialorder %v388, 0.0
    %vm391 = vcmp.gt.f32.partialorder %v389, 0.0
    %v392 = vmul.f32 %v388, 0.1
    %v393 = vmul.f32 %v389, 0.1
    %v394 = vsel %vm390, %v388, %v392
    %v395 = vsel %vm391, %v389, %v393
    %v396 = vpack.c.bf16 %v394, %v394
    %v397 = vpack.c.bf16 %v395, %v395
    %v398 = vld [vmem:[%s3] sm:$0xff]
    %v399 = vld [vmem:[%s3 + $0x8] sm:$0xff]
    %v400 = vld [vmem:[%s3 + $0x10] sm:$0xff]
    %v401 = vld [vmem:[%s3 + $0x18] sm:$0xff]
    %v402 = vld [vmem:[%s3 + $0x20] sm:$0xff]
    %v403 = vld [vmem:[%s3 + $0x28] sm:$0xff]
    %v404 = vld [vmem:[%s3 + $0x30] sm:$0xff]
    %v405 = vld [vmem:[%s3 + $0x38] sm:$0xff]
    %v406 = vld [vmem:[%s3 + $0x40] sm:$0xff]
    %v407 = vld [vmem:[%s3 + $0x48] sm:$0xff]
    %v408 = vld [vmem:[%s3 + $0x50] sm:$0xff]
    %v409 = vld [vmem:[%s3 + $0x58] sm:$0xff]
    %v410 = vld [vmem:[%s3 + $0x60] sm:$0xff]
    %v411 = vld [vmem:[%s3 + $0x68] sm:$0xff]
    %v412 = vld [vmem:[%s3 + $0x70] sm:$0xff]
    %v413 = vld [vmem:[%s3 + $0x78] sm:$0xff]
    %v414 = vld [vmem:[%s3 + $0x80] sm:$0xff]
    %v415 = vld [vmem:[%s3 + $0x88] sm:$0xff]
    %v416 = vld [vmem:[%s3 + $0x90] sm:$0xff]
    %v417 = vld [vmem:[%s3 + $0x98] sm:$0xff]
    %v418 = vld [vmem:[%s3 + $0xa0] sm:$0xff]
    %v419 = vld [vmem:[%s3 + $0xa8] sm:$0xff]
    %v420 = vld [vmem:[%s3 + $0xb0] sm:$0xff]
    %v421 = vld [vmem:[%s3 + $0xb8] sm:$0xff]
    %v422 = vld [vmem:[%s3 + $0xc0] sm:$0xff]
    %v423 = vld [vmem:[%s3 + $0xc8] sm:$0xff]
    %v424 = vld [vmem:[%s3 + $0xd0] sm:$0xff]
    %v425 = vld [vmem:[%s3 + $0xd8] sm:$0xff]
    %v426 = vld [vmem:[%s3 + $0xe0] sm:$0xff]
    %v427 = vld [vmem:[%s3 + $0xe8] sm:$0xff]
    %v428 = vld [vmem:[%s3 + $0xf0] sm:$0xff]
    %v429 = vld [vmem:[%s3 + $0xf8] sm:$0xff]
    %v430 = vld [vmem:[%s3 + $0x100] sm:$0xff]
    %v431 = vld [vmem:[%s3 + $0x108] sm:$0xff]
    %v432 = vld [vmem:[%s3 + $0x110] sm:$0xff]
    %v433 = vld [vmem:[%s3 + $0x118] sm:$0xff]
    %v434 = vld [vmem:[%s3 + $0x120] sm:$0xff]
    %v435 = vld [vmem:[%s3 + $0x128] sm:$0xff]
    %v436 = vld [vmem:[%s3 + $0x130] sm:$0xff]
    %v437 = vld [vmem:[%s3 + $0x138] sm:$0xff]
    %v438 = vld [vmem:[%s3 + $0x140] sm:$0xff]
    %v439 = vld [vmem:[%s3 + $0x148] sm:$0xff]
    %v440 = vld [vmem:[%s3 + $0x150] sm:$0xff]
    %v441 = vld [vmem:[%s3 + $0x158] sm:$0xff]
    %v442 = vld [vmem:[%s3 + $0x160] sm:$0xff]
    %v443 = vld [vmem:[%s3 + $0x168] sm:$0xff]
    %v444 = vld [vmem:[%s3 + $0x170] sm:$0xff]
    %v445 = vld [vmem:[%s3 + $0x178] sm:$0xff]
    %v446 = vld [vmem:[%s3 + $0x180] sm:$0x33]
    %v447 = vld [vmem:[%s3 + $0x188] sm:$0x33]
    %v498 = vunpack.c.l.b16 %v398
    %v499 = vunpack.c.h.b16 %v398
    %v500 = vunpack.c.l.b16 %v399
    %v501 = vunpack.c.h.b16 %v399
    %v502 = vunpack.c.l.b16 %v400
    %v503 = vunpack.c.h.b16 %v400
    %v504 = vunpack.c.l.b16 %v401
    %v505 = vunpack.c.h.b16 %v401
    %v506 = vunpack.c.l.b16 %v402
    %v507 = vunpack.c.h.b16 %v402
    %v508 = vunpack.c.l.b16 %v403
    %v509 = vunpack.c.h.b16 %v403
    %v510 = vunpack.c.l.b16 %v404
    %v511 = vunpack.c.h.b16 %v404
    %v512 = vunpack.c.l.b16 %v405
    %v513 = vunpack.c.h.b16 %v405
    %v514 = vunpack.c.l.b16 %v406
    %v515 = vunpack.c.h.b16 %v406
    %v516 = vunpack.c.l.b16 %v407
    %v517 = vunpack.c.h.b16 %v407
    %v518 = vunpack.c.l.b16 %v408
    %v519 = vunpack.c.h.b16 %v408
    %v520 = vunpack.c.l.b16 %v409
    %v521 = vunpack.c.h.b16 %v409
    %v522 = vunpack.c.l.b16 %v410
    %v523 = vunpack.c.h.b16 %v410
    %v524 = vunpack.c.l.b16 %v411
    %v525 = vunpack.c.h.b16 %v411
    %v526 = vunpack.c.l.b16 %v412
    %v527 = vunpack.c.h.b16 %v412
    %v528 = vunpack.c.l.b16 %v413
    %v529 = vunpack.c.h.b16 %v413
    %v530 = vunpack.c.l.b16 %v414
    %v531 = vunpack.c.h.b16 %v414
    %v532 = vunpack.c.l.b16 %v415
    %v533 = vunpack.c.h.b16 %v415
    %v534 = vunpack.c.l.b16 %v416
    %v535 = vunpack.c.h.b16 %v416
    %v536 = vunpack.c.l.b16 %v417
    %v537 = vunpack.c.h.b16 %v417
    %v538 = vunpack.c.l.b16 %v418
    %v539 = vunpack.c.h.b16 %v418
    %v540 = vunpack.c.l.b16 %v419
    %v541 = vunpack.c.h.b16 %v419
    %v542 = vunpack.c.l.b16 %v420
    %v543 = vunpack.c.h.b16 %v420
    %v544 = vunpack.c.l.b16 %v421
    %v545 = vunpack.c.h.b16 %v421
    %v546 = vunpack.c.l.b16 %v422
    %v547 = vunpack.c.h.b16 %v422
    %v548 = vunpack.c.l.b16 %v423
    %v549 = vunpack.c.h.b16 %v423
    %v550 = vunpack.c.l.b16 %v424
    %v551 = vunpack.c.h.b16 %v424
    %v552 = vunpack.c.l.b16 %v425
    %v553 = vunpack.c.h.b16 %v425
    %v554 = vunpack.c.l.b16 %v426
    %v555 = vunpack.c.h.b16 %v426
    %v556 = vunpack.c.l.b16 %v427
    %v557 = vunpack.c.h.b16 %v427
    %v558 = vunpack.c.l.b16 %v428
    %v559 = vunpack.c.h.b16 %v428
    %v560 = vunpack.c.l.b16 %v429
    %v561 = vunpack.c.h.b16 %v429
    %v562 = vunpack.c.l.b16 %v430
    %v563 = vunpack.c.h.b16 %v430
    %v564 = vunpack.c.l.b16 %v431
    %v565 = vunpack.c.h.b16 %v431
    %v566 = vunpack.c.l.b16 %v432
    %v567 = vunpack.c.h.b16 %v432
    %v568 = vunpack.c.l.b16 %v433
    %v569 = vunpack.c.h.b16 %v433
    %v570 = vunpack.c.l.b16 %v434
    %v571 = vunpack.c.h.b16 %v434
    %v572 = vunpack.c.l.b16 %v435
    %v573 = vunpack.c.h.b16 %v435
    %v574 = vunpack.c.l.b16 %v436
    %v575 = vunpack.c.h.b16 %v436
    %v576 = vunpack.c.l.b16 %v437
    %v577 = vunpack.c.h.b16 %v437
    %v578 = vunpack.c.l.b16 %v438
    %v579 = vunpack.c.h.b16 %v438
    %v580 = vunpack.c.l.b16 %v439
    %v581 = vunpack.c.h.b16 %v439
    %v582 = vunpack.c.l.b16 %v440
    %v583 = vunpack.c.h.b16 %v440
    %v584 = vunpack.c.l.b16 %v441
    %v585 = vunpack.c.h.b16 %v441
    %v586 = vunpack.c.l.b16 %v442
    %v587 = vunpack.c.h.b16 %v442
    %v588 = vunpack.c.l.b16 %v443
    %v589 = vunpack.c.h.b16 %v443
    %v590 = vunpack.c.l.b16 %v444
    %v591 = vunpack.c.h.b16 %v444
    %v592 = vunpack.c.l.b16 %v445
    %v593 = vunpack.c.h.b16 %v445
    %v594 = vunpack.c.l.b16 %v446
    %v595 = vunpack.c.h.b16 %v446
    %v596 = vunpack.c.l.b16 %v447
    %v597 = vunpack.c.h.b16 %v447
    %v598 = vpack.c.b16 %v502, %v498
    %v599 = vpack.c.b16 %v503, %v499
    %v600 = vpack.c.b16 %v504, %v500
    %v601 = vpack.c.b16 %v505, %v501
    %v602 = vpack.c.b16 %v510, %v506
    %v603 = vpack.c.b16 %v511, %v507
    %v604 = vpack.c.b16 %v512, %v508
    %v605 = vpack.c.b16 %v513, %v509
    %v606 = vpack.c.b16 %v518, %v514
    %v607 = vpack.c.b16 %v519, %v515
    %v608 = vpack.c.b16 %v520, %v516
    %v609 = vpack.c.b16 %v521, %v517
    %v610 = vpack.c.b16 %v526, %v522
    %v611 = vpack.c.b16 %v527, %v523
    %v612 = vpack.c.b16 %v528, %v524
    %v613 = vpack.c.b16 %v529, %v525
    %v614 = vpack.c.b16 %v534, %v530
    %v615 = vpack.c.b16 %v535, %v531
    %v616 = vpack.c.b16 %v536, %v532
    %v617 = vpack.c.b16 %v537, %v533
    %v618 = vpack.c.b16 %v542, %v538
    %v619 = vpack.c.b16 %v543, %v539
    %v620 = vpack.c.b16 %v544, %v540
    %v621 = vpack.c.b16 %v545, %v541
    %v622 = vpack.c.b16 %v550, %v546
    %v623 = vpack.c.b16 %v551, %v547
    %v624 = vpack.c.b16 %v552, %v548
    %v625 = vpack.c.b16 %v553, %v549
    %v626 = vpack.c.b16 %v558, %v554
    %v627 = vpack.c.b16 %v559, %v555
    %v628 = vpack.c.b16 %v560, %v556
    %v629 = vpack.c.b16 %v561, %v557
    %v630 = vpack.c.b16 %v566, %v562
    %v631 = vpack.c.b16 %v567, %v563
    %v632 = vpack.c.b16 %v568, %v564
    %v633 = vpack.c.b16 %v569, %v565
    %v634 = vpack.c.b16 %v574, %v570
    %v635 = vpack.c.b16 %v575, %v571
    %v636 = vpack.c.b16 %v576, %v572
    %v637 = vpack.c.b16 %v577, %v573
    %v638 = vpack.c.b16 %v582, %v578
    %v639 = vpack.c.b16 %v583, %v579
    %v640 = vpack.c.b16 %v584, %v580
    %v641 = vpack.c.b16 %v585, %v581
    %v642 = vpack.c.b16 %v590, %v586
    %v643 = vpack.c.b16 %v591, %v587
    %v644 = vpack.c.b16 %v592, %v588
    %v645 = vpack.c.b16 %v593, %v589
    %v646 = vpack.c.b16 %v594, %v594
    %v647 = vpack.c.b16 %v595, %v595
    %v648 = vpack.c.b16 %v596, %v596
    %v649 = vpack.c.b16 %v597, %v597
    %v699 = vsel %vm291, %v397, 0
    %vm701 = vcmask 1041408
    %v703 = vsel %vm701, %v646, 0
    %v706 = vsel %vm701, %v647, 0
    %v709 = vsel %vm701, %v648, 0
    %v712 = vsel %vm701, %v649, 0
    %714 = vmatprep.subr.bf16.mxu0 %v627
    %715 = vmatpush1.bf16.msra.mxu0 %v626
    %716 = vmatprep.subr.bf16.mxu0 %v623
    %717 = vmatpush1.bf16.msra.mxu0 %v622
    %718 = vmatprep.subr.bf16.mxu0 %v619
    %719 = vmatpush1.bf16.msra.mxu0 %v618
    %720 = vmatprep.subr.bf16.mxu0 %v615
    %721 = vmatpush1.bf16.msra.mxu0 %v614
    %722 = vmatprep.subr.bf16.mxu0 %v611
    %723 = vmatpush1.bf16.msra.mxu0 %v610
    %724 = vmatprep.subr.bf16.mxu0 %v607
    %725 = vmatpush1.bf16.msra.mxu0 %v606
    %726 = vmatprep.subr.bf16.mxu0 %v603
    %727 = vmatpush1.bf16.msra.mxu0 %v602
    %728 = vmatprep.subr.bf16.mxu0 %v599
    %729 = vmatpush1.bf16.msra.mxu0 %v598
    %730 = vmatprep.subr.bf16.mxu0 0
    %731 = vmatpush2.bf16.msra.mxu0 0
    %732 = vmatprep.subr.bf16.mxu0 0
    %733 = vmatpush2.bf16.msra.mxu0 0
    %734 = vmatprep.subr.bf16.mxu0 0
    %735 = vmatpush2.bf16.msra.mxu0 0
    %736 = vmatprep.subr.bf16.mxu0 %v706
    %737 = vmatpush2.bf16.msra.mxu0 %v703
    %738 = vmatprep.subr.bf16.mxu0 %v643
    %739 = vmatpush2.bf16.msra.mxu0 %v642
    %740 = vmatprep.subr.bf16.mxu0 %v639
    %741 = vmatpush2.bf16.msra.mxu0 %v638
    %742 = vmatprep.subr.bf16.mxu0 %v635
    %743 = vmatpush2.bf16.msra.mxu0 %v634
    %744 = vmatprep.subr.bf16.mxu0 %v631
    %745 = vmatpush2.bf16.msra.mxu0 %v630
    %746 = vmatprep.mubr.bf16.mxu0 %v699
    %747 = vmatmul.mubr.bf16.gmra.mxu0 %v396
    %v748 = vpop.f32.mrf.mxu0
    %v749 = vadd.f32 0.0, %v748
    %v750 = vpop.f32.mrf.mxu0
    %v751 = vadd.f32 0.0, %v750
    %v752 = vpop.f32.mrf.mxu0
    %v753 = vpop.f32.mrf.mxu0
    %754 = vdwg.mxu0
    %755 = vmatprep.subr.bf16.mxu0 %v629
    %756 = vmatpush1.bf16.msra.mxu0 %v628
    %757 = vmatprep.subr.bf16.mxu0 %v625
    %758 = vmatpush1.bf16.msra.mxu0 %v624
    %759 = vmatprep.subr.bf16.mxu0 %v621
    %760 = vmatpush1.bf16.msra.mxu0 %v620
    %761 = vmatprep.subr.bf16.mxu0 %v617
    %762 = vmatpush1.bf16.msra.mxu0 %v616
    %763 = vmatprep.subr.bf16.mxu0 %v613
    %764 = vmatpush1.bf16.msra.mxu0 %v612
    %765 = vmatprep.subr.bf16.mxu0 %v609
    %766 = vmatpush1.bf16.msra.mxu0 %v608
    %767 = vmatprep.subr.bf16.mxu0 %v605
    %768 = vmatpush1.bf16.msra.mxu0 %v604
    %769 = vmatprep.subr.bf16.mxu0 %v601
    %770 = vmatpush1.bf16.msra.mxu0 %v600
    %771 = vmatprep.subr.bf16.mxu0 0
    %772 = vmatpush2.bf16.msra.mxu0 0
    %773 = vmatprep.subr.bf16.mxu0 0
    %774 = vmatpush2.bf16.msra.mxu0 0
    %775 = vmatprep.subr.bf16.mxu0 0
    %776 = vmatpush2.bf16.msra.mxu0 0
    %777 = vmatprep.subr.bf16.mxu0 %v712
    %778 = vmatpush2.bf16.msra.mxu0 %v709
    %779 = vmatprep.subr.bf16.mxu0 %v645
    %780 = vmatpush2.bf16.msra.mxu0 %v644
    %781 = vmatprep.subr.bf16.mxu0 %v641
    %782 = vmatpush2.bf16.msra.mxu0 %v640
    %783 = vmatprep.subr.bf16.mxu0 %v637
    %784 = vmatpush2.bf16.msra.mxu0 %v636
    %785 = vmatprep.subr.bf16.mxu0 %v633
    %786 = vmatpush2.bf16.msra.mxu0 %v632
    %787 = vmatprep.mubr.bf16.mxu0 %v699
    %788 = vmatmul.mubr.bf16.gmra.mxu0 %v396
    %v789 = vpop.f32.mrf.mxu0
    %v790 = vadd.f32 0.0, %v789
    %v791 = vpop.f32.mrf.mxu0
    %v792 = vadd.f32 0.0, %v791
    %v793 = vpop.f32.mrf.mxu0
    %v794 = vpop.f32.mrf.mxu0
    %795 = vdwg.mxu0
    %v796 = vrot.slane %v749, 4
    %v797 = vadd.f32 %v749, %v796
    %v798 = vrot.slane %v797, 2
    %v799 = vadd.f32 %v797, %v798
    %v800 = vrot.slane %v799, 1
    %v801 = vadd.f32 %v799, %v800
    %v802 = vrot.slane %v751, 4
    %v803 = vadd.f32 %v751, %v802
    %v804 = vrot.slane %v803, 2
    %v805 = vadd.f32 %v803, %v804
    %v806 = vrot.slane %v805, 1
    %v807 = vadd.f32 %v805, %v806
    %v808 = vrot.slane %v790, 4
    %v809 = vadd.f32 %v790, %v808
    %v810 = vrot.slane %v809, 2
    %v811 = vadd.f32 %v809, %v810
    %v812 = vrot.slane %v811, 1
    %v813 = vadd.f32 %v811, %v812
    %vm814 = vcmask 64512
    %v815 = vsel %vm814, %v792, 0.0
    %v816 = vrot.slane %v815, 4
    %v817 = vadd.f32 %v815, %v816
    %v818 = vrot.slane %v817, 2
    %v819 = vadd.f32 %v817, %v818
    %v820 = vrot.slane %v819, 1
    %v821 = vadd.f32 %v819, %v820
    %v822 = vmul.f32 %v801, %v114
    %v823 = vmul.f32 %v807, %v114
    %v824 = vmul.f32 %v813, %v114
    %v825 = vmul.f32 %v821, %v114
    %v826 = vsub.f32 %v749, %v822
    %v827 = vsub.f32 %v751, %v823
    %v828 = vsub.f32 %v790, %v824
    %v829 = vsub.f32 %v792, %v825
    %v830 = vmul.f32 %v826, %v826
    %v831 = vmul.f32 %v827, %v827
    %v832 = vmul.f32 %v828, %v828
    %v833 = vmul.f32 %v829, %v829
    %v834 = vrot.slane %v830, 4
    %v835 = vadd.f32 %v830, %v834
    %v836 = vrot.slane %v835, 2
    %v837 = vadd.f32 %v835, %v836
    %v838 = vrot.slane %v837, 1
    %v839 = vadd.f32 %v837, %v838
    %v840 = vrot.slane %v831, 4
    %v841 = vadd.f32 %v831, %v840
    %v842 = vrot.slane %v841, 2
    %v843 = vadd.f32 %v841, %v842
    %v844 = vrot.slane %v843, 1
    %v845 = vadd.f32 %v843, %v844
    %v846 = vrot.slane %v832, 4
    %v847 = vadd.f32 %v832, %v846
    %v848 = vrot.slane %v847, 2
    %v849 = vadd.f32 %v847, %v848
    %v850 = vrot.slane %v849, 1
    %v851 = vadd.f32 %v849, %v850
    %v852 = vsel %vm814, %v833, 0.0
    %v853 = vrot.slane %v852, 4
    %v854 = vadd.f32 %v852, %v853
    %v855 = vrot.slane %v854, 2
    %v856 = vadd.f32 %v854, %v855
    %v857 = vrot.slane %v856, 1
    %v858 = vadd.f32 %v856, %v857
    %v859 = vmul.f32 %v839, %v114
    %v860 = vmul.f32 %v845, %v114
    %v861 = vmul.f32 %v851, %v114
    %v862 = vmul.f32 %v858, %v114
    %v863 = vadd.f32 %v859, 1e-05
    %v864 = vadd.f32 %v860, 1e-05
    %v865 = vadd.f32 %v861, 1e-05
    %v866 = vadd.f32 %v862, 1e-05
    %v867 = vrsqrt.pop %v863
    %v868 = vrsqrt.pop %v864
    %v869 = vrsqrt.pop %v865
    %v870 = vrsqrt.pop %v866
    %v875 = vcombine.low %v867, %v868
    %v876 = vcombine.low %v869, %v870
    %v878 = vunpack.c.l.s4 1966171168
    %v879 = vunpack.c.0.s8 %v878
    %v880 = vlaneseq
    %v881 = vshrl.u32 %v880, 7
    %v882 = vsub.s32 %v879, %v881
    %v883 = vrot.slane %v875, %v882
    %v885 = vunpack.c.l.s4 1966171168
    %v886 = vunpack.c.0.s8 %v885
    %v887 = vlaneseq
    %v888 = vshrl.u32 %v887, 7
    %v889 = vsub.s32 %v886, %v888
    %v890 = vrot.slane %v876, %v889
    %v891 = vcombine.low %v883, %v890
    %v893 = vunpack.c.l.s4 1966171168
    %v894 = vunpack.c.0.s8 %v893
    %v895 = vlaneseq
    %v896 = vshrl.u32 %v895, 7
    %v897 = vsub.s32 %v894, %v896
    %v898 = vrot.slane %v891, %v897
    %v900 = vmul.f32 %v43, %v898
    %v902 = vlaneseq
    %v903 = vshrl.u32 %v902, 7
    %v904 = vsub.s32 0, %v903
    %v905 = vrot.slane %v900, %v904
    %v906 = vlaneseq
    %v907 = vshrl.u32 %v906, 7
    %v908 = vsub.s32 1, %v907
    %v909 = vrot.slane %v900, %v908
    %v910 = vlaneseq
    %v911 = vshrl.u32 %v910, 7
    %v912 = vsub.s32 2, %v911
    %v913 = vrot.slane %v900, %v912
    %v914 = vlaneseq
    %v915 = vshrl.u32 %v914, 7
    %v916 = vsub.s32 3, %v915
    %v917 = vrot.slane %v900, %v916
    %v922 = vmul.f32 %v822, %v905
    %v923 = vmul.f32 %v823, %v909
    %v924 = vmul.f32 %v824, %v913
    %v925 = vmul.f32 %v825, %v917
    %v930 = vcombine.low %v922, %v923
    %v931 = vcombine.low %v924, %v925
    %v933 = vunpack.c.l.s4 1966171168
    %v934 = vunpack.c.0.s8 %v933
    %v935 = vlaneseq
    %v936 = vshrl.u32 %v935, 7
    %v937 = vsub.s32 %v934, %v936
    %v938 = vrot.slane %v930, %v937
    %v940 = vunpack.c.l.s4 1966171168
    %v941 = vunpack.c.0.s8 %v940
    %v942 = vlaneseq
    %v943 = vshrl.u32 %v942, 7
    %v944 = vsub.s32 %v941, %v943
    %v945 = vrot.slane %v931, %v944
    %v946 = vcombine.low %v938, %v945
    %v948 = vunpack.c.l.s4 1966171168
    %v949 = vunpack.c.0.s8 %v948
    %v950 = vlaneseq
    %v951 = vshrl.u32 %v950, 7
    %v952 = vsub.s32 %v949, %v951
    %v953 = vrot.slane %v946, %v952
    %v955 = vsub.f32 %v44, %v953
    %v956 = vmul.f32 %v749, %v905
    %v957 = vmul.f32 %v751, %v909
    %v958 = vmul.f32 %v790, %v913
    %v959 = vmul.f32 %v792, %v917
    %v961 = vlaneseq
    %v962 = vshrl.u32 %v961, 7
    %v963 = vsub.s32 0, %v962
    %v964 = vrot.slane %v955, %v963
    %v965 = vlaneseq
    %v966 = vshrl.u32 %v965, 7
    %v967 = vsub.s32 1, %v966
    %v968 = vrot.slane %v955, %v967
    %v969 = vlaneseq
    %v970 = vshrl.u32 %v969, 7
    %v971 = vsub.s32 2, %v970
    %v972 = vrot.slane %v955, %v971
    %v973 = vlaneseq
    %v974 = vshrl.u32 %v973, 7
    %v975 = vsub.s32 3, %v974
    %v976 = vrot.slane %v955, %v975
    %v981 = vadd.f32 %v956, %v964
    %v982 = vadd.f32 %v957, %v968
    %v983 = vadd.f32 %v958, %v972
    %v984 = vadd.f32 %v959, %v976
    %vm985 = vcmp.gt.f32.partialorder %v981, 0.0
    %vm986 = vcmp.gt.f32.partialorder %v982, 0.0
    %vm987 = vcmp.gt.f32.partialorder %v983, 0.0
    %vm988 = vcmp.gt.f32.partialorder %v984, 0.0
    %v989 = vmul.f32 %v981, 0.1
    %v990 = vmul.f32 %v982, 0.1
    %v991 = vmul.f32 %v983, 0.1
    %v992 = vmul.f32 %v984, 0.1
    %v993 = vsel %vm985, %v981, %v989
    %v994 = vsel %vm986, %v982, %v990
    %v995 = vsel %vm987, %v983, %v991
    %v996 = vsel %vm988, %v984, %v992
    %v997 = vpack.c.bf16 %v993, %v993
    %v998 = vpack.c.bf16 %v994, %v994
    %v999 = vpack.c.bf16 %v995, %v995
    %v1000 = vpack.c.bf16 %v996, %v996
    %v1001 = vld [vmem:[#allocation2] sm:$0xff]
    %v1002 = vld [vmem:[#allocation2 + $0x8] sm:$0xff]
    %v1003 = vld [vmem:[#allocation2 + $0x10] sm:$0xff]
    %v1004 = vld [vmem:[#allocation2 + $0x18] sm:$0xf]
    %v1005 = vld [vmem:[#allocation2 + $0x1c] sm:$0xff]
    %v1006 = vld [vmem:[#allocation2 + $0x24] sm:$0xff]
    %v1007 = vld [vmem:[#allocation2 + $0x2c] sm:$0xff]
    %v1008 = vld [vmem:[#allocation2 + $0x34] sm:$0xf]
    %v1009 = vld [vmem:[#allocation2 + $0x38] sm:$0xff]
    %v1010 = vld [vmem:[#allocation2 + $0x40] sm:$0xff]
    %v1011 = vld [vmem:[#allocation2 + $0x48] sm:$0xff]
    %v1012 = vld [vmem:[#allocation2 + $0x50] sm:$0xf]
    %v1013 = vld [vmem:[#allocation2 + $0x54] sm:$0xff]
    %v1014 = vld [vmem:[#allocation2 + $0x5c] sm:$0xff]
    %v1015 = vld [vmem:[#allocation2 + $0x64] sm:$0xff]
    %v1016 = vld [vmem:[#allocation2 + $0x6c] sm:$0xf]
    %v1017 = vld [vmem:[#allocation2 + $0x70] sm:$0xff]
    %v1018 = vld [vmem:[#allocation2 + $0x78] sm:$0xff]
    %v1019 = vld [vmem:[#allocation2 + $0x80] sm:$0xff]
    %v1020 = vld [vmem:[#allocation2 + $0x88] sm:$0xf]
    %v1021 = vld [vmem:[#allocation2 + $0x8c] sm:$0xff]
    %v1022 = vld [vmem:[#allocation2 + $0x94] sm:$0xff]
    %v1023 = vld [vmem:[#allocation2 + $0x9c] sm:$0xff]
    %v1024 = vld [vmem:[#allocation2 + $0xa4] sm:$0xf]
    %v1025 = vld [vmem:[#allocation2 + $0xa8] sm:$0xff]
    %v1026 = vld [vmem:[#allocation2 + $0xb0] sm:$0xff]
    %v1027 = vld [vmem:[#allocation2 + $0xb8] sm:$0xff]
    %v1028 = vld [vmem:[#allocation2 + $0xc0] sm:$0xf]
    %v1029 = vld [vmem:[#allocation2 + $0xc4] sm:$0xff]
    %v1030 = vld [vmem:[#allocation2 + $0xcc] sm:$0xff]
    %v1031 = vld [vmem:[#allocation2 + $0xd4] sm:$0xff]
    %v1032 = vld [vmem:[#allocation2 + $0xdc] sm:$0xf]
    %v1033 = vld [vmem:[#allocation2 + $0xe0] sm:$0xff]
    %v1034 = vld [vmem:[#allocation2 + $0xe8] sm:$0xff]
    %v1035 = vld [vmem:[#allocation2 + $0xf0] sm:$0xff]
    %v1036 = vld [vmem:[#allocation2 + $0xf8] sm:$0xf]
    %v1037 = vld [vmem:[#allocation2 + $0xfc] sm:$0xff]
    %v1038 = vld [vmem:[#allocation2 + $0x104] sm:$0xff]
    %v1039 = vld [vmem:[#allocation2 + $0x10c] sm:$0xff]
    %v1040 = vld [vmem:[#allocation2 + $0x114] sm:$0xf]
    %v1041 = vld [vmem:[#allocation2 + $0x118] sm:$0xff]
    %v1042 = vld [vmem:[#allocation2 + $0x120] sm:$0xff]
    %v1043 = vld [vmem:[#allocation2 + $0x128] sm:$0xff]
    %v1044 = vld [vmem:[#allocation2 + $0x130] sm:$0xf]
    %v1045 = vld [vmem:[#allocation2 + $0x134] sm:$0xff]
    %v1046 = vld [vmem:[#allocation2 + $0x13c] sm:$0xff]
    %v1047 = vld [vmem:[#allocation2 + $0x144] sm:$0xff]
    %v1048 = vld [vmem:[#allocation2 + $0x14c] sm:$0xf]
    %v1049 = vld [vmem:[#allocation2 + $0x150] sm:$0xff]
    %v1050 = vld [vmem:[#allocation2 + $0x158] sm:$0xff]
    %v1051 = vld [vmem:[#allocation2 + $0x160] sm:$0xff]
    %v1052 = vld [vmem:[#allocation2 + $0x168] sm:$0xf]
    %v1053 = vld [vmem:[#allocation2 + $0x16c] sm:$0xff]
    %v1054 = vld [vmem:[#allocation2 + $0x174] sm:$0xff]
    %v1055 = vld [vmem:[#allocation2 + $0x17c] sm:$0xff]
    %v1056 = vld [vmem:[#allocation2 + $0x184] sm:$0xf]
    %v1057 = vld [vmem:[#allocation2 + $0x188] sm:$0xff]
    %v1058 = vld [vmem:[#allocation2 + $0x190] sm:$0xff]
    %v1059 = vld [vmem:[#allocation2 + $0x198] sm:$0xff]
    %v1060 = vld [vmem:[#allocation2 + $0x1a0] sm:$0xf]
    %v1061 = vld [vmem:[#allocation2 + $0x1a4] sm:$0xff]
    %v1062 = vld [vmem:[#allocation2 + $0x1ac] sm:$0xff]
    %v1063 = vld [vmem:[#allocation2 + $0x1b4] sm:$0xff]
    %v1064 = vld [vmem:[#allocation2 + $0x1bc] sm:$0xf]
    %v1065 = vld [vmem:[#allocation2 + $0x1c0] sm:$0xff]
    %v1066 = vld [vmem:[#allocation2 + $0x1c8] sm:$0xff]
    %v1067 = vld [vmem:[#allocation2 + $0x1d0] sm:$0xff]
    %v1068 = vld [vmem:[#allocation2 + $0x1d8] sm:$0xf]
    %v1069 = vld [vmem:[#allocation2 + $0x1dc] sm:$0xff]
    %v1070 = vld [vmem:[#allocation2 + $0x1e4] sm:$0xff]
    %v1071 = vld [vmem:[#allocation2 + $0x1ec] sm:$0xff]
    %v1072 = vld [vmem:[#allocation2 + $0x1f4] sm:$0xf]
    %v1073 = vld [vmem:[#allocation2 + $0x1f8] sm:$0xff]
    %v1074 = vld [vmem:[#allocation2 + $0x200] sm:$0xff]
    %v1075 = vld [vmem:[#allocation2 + $0x208] sm:$0xff]
    %v1076 = vld [vmem:[#allocation2 + $0x210] sm:$0xf]
    %v1077 = vld [vmem:[#allocation2 + $0x214] sm:$0xff]
    %v1078 = vld [vmem:[#allocation2 + $0x21c] sm:$0xff]
    %v1079 = vld [vmem:[#allocation2 + $0x224] sm:$0xff]
    %v1080 = vld [vmem:[#allocation2 + $0x22c] sm:$0xf]
    %v1081 = vld [vmem:[#allocation2 + $0x230] sm:$0xff]
    %v1082 = vld [vmem:[#allocation2 + $0x238] sm:$0xff]
    %v1083 = vld [vmem:[#allocation2 + $0x240] sm:$0xff]
    %v1084 = vld [vmem:[#allocation2 + $0x248] sm:$0xf]
    %v1085 = vld [vmem:[#allocation2 + $0x24c] sm:$0xff]
    %v1086 = vld [vmem:[#allocation2 + $0x254] sm:$0xff]
    %v1087 = vld [vmem:[#allocation2 + $0x25c] sm:$0xff]
    %v1088 = vld [vmem:[#allocation2 + $0x264] sm:$0xf]
    %v1089 = vld [vmem:[#allocation2 + $0x268] sm:$0xff]
    %v1090 = vld [vmem:[#allocation2 + $0x270] sm:$0xff]
    %v1091 = vld [vmem:[#allocation2 + $0x278] sm:$0xff]
    %v1092 = vld [vmem:[#allocation2 + $0x280] sm:$0xf]
    %v1093 = vld [vmem:[#allocation2 + $0x284] sm:$0xff]
    %v1094 = vld [vmem:[#allocation2 + $0x28c] sm:$0xff]
    %v1095 = vld [vmem:[#allocation2 + $0x294] sm:$0xff]
    %v1096 = vld [vmem:[#allocation2 + $0x29c] sm:$0xf]
    %v1097 = vld [vmem:[#allocation2 + $0x2a0] sm:$0xff]
    %v1098 = vld [vmem:[#allocation2 + $0x2a8] sm:$0xff]
    %v1099 = vld [vmem:[#allocation2 + $0x2b0] sm:$0xff]
    %v1100 = vld [vmem:[#allocation2 + $0x2b8] sm:$0xf]
    %v1101 = vld [vmem:[#allocation2 + $0x2bc] sm:$0xff]
    %v1102 = vld [vmem:[#allocation2 + $0x2c4] sm:$0xff]
    %v1103 = vld [vmem:[#allocation2 + $0x2cc] sm:$0xff]
    %v1104 = vld [vmem:[#allocation2 + $0x2d4] sm:$0xf]
    %v1105 = vld [vmem:[#allocation2 + $0x2d8] sm:$0xff]
    %v1106 = vld [vmem:[#allocation2 + $0x2e0] sm:$0xff]
    %v1107 = vld [vmem:[#allocation2 + $0x2e8] sm:$0xff]
    %v1108 = vld [vmem:[#allocation2 + $0x2f0] sm:$0xf]
    %v1109 = vld [vmem:[#allocation2 + $0x2f4] sm:$0xff]
    %v1110 = vld [vmem:[#allocation2 + $0x2fc] sm:$0xff]
    %v1111 = vld [vmem:[#allocation2 + $0x304] sm:$0xff]
    %v1112 = vld [vmem:[#allocation2 + $0x30c] sm:$0xf]
    %v1113 = vld [vmem:[#allocation2 + $0x310] sm:$0xff]
    %v1114 = vld [vmem:[#allocation2 + $0x318] sm:$0xff]
    %v1115 = vld [vmem:[#allocation2 + $0x320] sm:$0xff]
    %v1116 = vld [vmem:[#allocation2 + $0x328] sm:$0xf]
    %v1117 = vld [vmem:[#allocation2 + $0x32c] sm:$0xff]
    %v1118 = vld [vmem:[#allocation2 + $0x334] sm:$0xff]
    %v1119 = vld [vmem:[#allocation2 + $0x33c] sm:$0xff]
    %v1120 = vld [vmem:[#allocation2 + $0x344] sm:$0xf]
    %v1121 = vld [vmem:[#allocation2 + $0x348] sm:$0xff]
    %v1122 = vld [vmem:[#allocation2 + $0x350] sm:$0xff]
    %v1123 = vld [vmem:[#allocation2 + $0x358] sm:$0xff]
    %v1124 = vld [vmem:[#allocation2 + $0x360] sm:$0xf]
    %v1125 = vld [vmem:[#allocation2 + $0x364] sm:$0xff]
    %v1126 = vld [vmem:[#allocation2 + $0x36c] sm:$0xff]
    %v1127 = vld [vmem:[#allocation2 + $0x374] sm:$0xff]
    %v1128 = vld [vmem:[#allocation2 + $0x37c] sm:$0xf]
    %v1129 = vld [vmem:[#allocation2 + $0x380] sm:$0xff]
    %v1130 = vld [vmem:[#allocation2 + $0x388] sm:$0xff]
    %v1131 = vld [vmem:[#allocation2 + $0x390] sm:$0xff]
    %v1132 = vld [vmem:[#allocation2 + $0x398] sm:$0xf]
    %v1133 = vld [vmem:[#allocation2 + $0x39c] sm:$0xff]
    %v1134 = vld [vmem:[#allocation2 + $0x3a4] sm:$0xff]
    %v1135 = vld [vmem:[#allocation2 + $0x3ac] sm:$0xff]
    %v1136 = vld [vmem:[#allocation2 + $0x3b4] sm:$0xf]
    %v1137 = vld [vmem:[#allocation2 + $0x3b8] sm:$0xff]
    %v1138 = vld [vmem:[#allocation2 + $0x3c0] sm:$0xff]
    %v1139 = vld [vmem:[#allocation2 + $0x3c8] sm:$0xff]
    %v1140 = vld [vmem:[#allocation2 + $0x3d0] sm:$0xf]
    %v1141 = vld [vmem:[#allocation2 + $0x3d4] sm:$0xff]
    %v1142 = vld [vmem:[#allocation2 + $0x3dc] sm:$0xff]
    %v1143 = vld [vmem:[#allocation2 + $0x3e4] sm:$0xff]
    %v1144 = vld [vmem:[#allocation2 + $0x3ec] sm:$0xf]
    %v1145 = vld [vmem:[#allocation2 + $0x3f0] sm:$0xff]
    %v1146 = vld [vmem:[#allocation2 + $0x3f8] sm:$0xff]
    %v1147 = vld [vmem:[#allocation2 + $0x400] sm:$0xff]
    %v1148 = vld [vmem:[#allocation2 + $0x408] sm:$0xf]
    %v1149 = vld [vmem:[#allocation2 + $0x40c] sm:$0xff]
    %v1150 = vld [vmem:[#allocation2 + $0x414] sm:$0xff]
    %v1151 = vld [vmem:[#allocation2 + $0x41c] sm:$0xff]
    %v1152 = vld [vmem:[#allocation2 + $0x424] sm:$0xf]
    %v1153 = vld [vmem:[#allocation2 + $0x428] sm:$0xff]
    %v1154 = vld [vmem:[#allocation2 + $0x430] sm:$0xff]
    %v1155 = vld [vmem:[#allocation2 + $0x438] sm:$0xff]
    %v1156 = vld [vmem:[#allocation2 + $0x440] sm:$0xf]
    %v1157 = vld [vmem:[#allocation2 + $0x444] sm:$0xff]
    %v1158 = vld [vmem:[#allocation2 + $0x44c] sm:$0xff]
    %v1159 = vld [vmem:[#allocation2 + $0x454] sm:$0xff]
    %v1160 = vld [vmem:[#allocation2 + $0x45c] sm:$0xf]
    %v1161 = vld [vmem:[#allocation2 + $0x460] sm:$0xff]
    %v1162 = vld [vmem:[#allocation2 + $0x468] sm:$0xff]
    %v1163 = vld [vmem:[#allocation2 + $0x470] sm:$0xff]
    %v1164 = vld [vmem:[#allocation2 + $0x478] sm:$0xf]
    %v1165 = vld [vmem:[#allocation2 + $0x47c] sm:$0xff]
    %v1166 = vld [vmem:[#allocation2 + $0x484] sm:$0xff]
    %v1167 = vld [vmem:[#allocation2 + $0x48c] sm:$0xff]
    %v1168 = vld [vmem:[#allocation2 + $0x494] sm:$0xf]
    %v1169 = vld [vmem:[#allocation2 + $0x498] sm:$0xff]
    %v1170 = vld [vmem:[#allocation2 + $0x4a0] sm:$0xff]
    %v1171 = vld [vmem:[#allocation2 + $0x4a8] sm:$0xff]
    %v1172 = vld [vmem:[#allocation2 + $0x4b0] sm:$0xf]
    %v1173 = vld [vmem:[#allocation2 + $0x4b4] sm:$0xff]
    %v1174 = vld [vmem:[#allocation2 + $0x4bc] sm:$0xff]
    %v1175 = vld [vmem:[#allocation2 + $0x4c4] sm:$0xff]
    %v1176 = vld [vmem:[#allocation2 + $0x4cc] sm:$0xf]
    %v1177 = vld [vmem:[#allocation2 + $0x4d0] sm:$0xff]
    %v1178 = vld [vmem:[#allocation2 + $0x4d8] sm:$0xff]
    %v1179 = vld [vmem:[#allocation2 + $0x4e0] sm:$0xff]
    %v1180 = vld [vmem:[#allocation2 + $0x4e8] sm:$0xf]
    %v1181 = vld [vmem:[#allocation2 + $0x4ec] sm:$0xff]
    %v1182 = vld [vmem:[#allocation2 + $0x4f4] sm:$0xff]
    %v1183 = vld [vmem:[#allocation2 + $0x4fc] sm:$0xff]
    %v1184 = vld [vmem:[#allocation2 + $0x504] sm:$0xf]
    %v1185 = vld [vmem:[#allocation2 + $0x508] sm:$0xff]
    %v1186 = vld [vmem:[#allocation2 + $0x510] sm:$0xff]
    %v1187 = vld [vmem:[#allocation2 + $0x518] sm:$0xff]
    %v1188 = vld [vmem:[#allocation2 + $0x520] sm:$0xf]
    %v1189 = vld [vmem:[#allocation2 + $0x524] sm:$0xff]
    %v1190 = vld [vmem:[#allocation2 + $0x52c] sm:$0xff]
    %v1191 = vld [vmem:[#allocation2 + $0x534] sm:$0xff]
    %v1192 = vld [vmem:[#allocation2 + $0x53c] sm:$0xf]
    %v1193 = vld [vmem:[#allocation2 + $0x540] sm:$0xff]
    %v1194 = vld [vmem:[#allocation2 + $0x548] sm:$0xff]
    %v1195 = vld [vmem:[#allocation2 + $0x550] sm:$0xff]
    %v1196 = vld [vmem:[#allocation2 + $0x558] sm:$0xf]
    %v1198 = vlaneseq
    %v1199 = vshrl.u32 %v1198, 7
    %v1200 = vsub.s32 0, %v1199
    %v1201 = vrot.slane %v45, %v1200
    %v1202 = vlaneseq
    %v1203 = vshrl.u32 %v1202, 7
    %v1204 = vsub.s32 1, %v1203
    %v1205 = vrot.slane %v45, %v1204
    %v1206 = vlaneseq
    %v1207 = vshrl.u32 %v1206, 7
    %v1208 = vsub.s32 2, %v1207
    %v1209 = vrot.slane %v45, %v1208
    %v1210 = vlaneseq
    %v1211 = vshrl.u32 %v1210, 7
    %v1212 = vsub.s32 3, %v1211
    %v1213 = vrot.slane %v45, %v1212
    %v1214 = vlaneseq
    %v1215 = vshrl.u32 %v1214, 7
    %v1216 = vsub.s32 4, %v1215
    %v1217 = vrot.slane %v45, %v1216
    %v1218 = vlaneseq
    %v1219 = vshrl.u32 %v1218, 7
    %v1220 = vsub.s32 5, %v1219
    %v1221 = vrot.slane %v45, %v1220
    %v1222 = vlaneseq
    %v1223 = vshrl.u32 %v1222, 7
    %v1224 = vsub.s32 6, %v1223
    %v1225 = vrot.slane %v45, %v1224
    %v1429 = vunpack.c.l.b16 %v1001
    %v1430 = vunpack.c.h.b16 %v1001
    %v1431 = vunpack.c.l.b16 %v1002
    %v1432 = vunpack.c.h.b16 %v1002
    %v1433 = vunpack.c.l.b16 %v1003
    %v1434 = vunpack.c.h.b16 %v1003
    %v1435 = vunpack.c.l.b16 %v1004
    %v1436 = vunpack.c.l.b16 %v1005
    %v1437 = vunpack.c.h.b16 %v1005
    %v1438 = vunpack.c.l.b16 %v1006
    %v1439 = vunpack.c.h.b16 %v1006
    %v1440 = vunpack.c.l.b16 %v1007
    %v1441 = vunpack.c.h.b16 %v1007
    %v1442 = vunpack.c.l.b16 %v1008
    %v1443 = vunpack.c.l.b16 %v1009
    %v1444 = vunpack.c.h.b16 %v1009
    %v1445 = vunpack.c.l.b16 %v1010
    %v1446 = vunpack.c.h.b16 %v1010
    %v1447 = vunpack.c.l.b16 %v1011
    %v1448 = vunpack.c.h.b16 %v1011
    %v1449 = vunpack.c.l.b16 %v1012
    %v1450 = vunpack.c.l.b16 %v1013
    %v1451 = vunpack.c.h.b16 %v1013
    %v1452 = vunpack.c.l.b16 %v1014
    %v1453 = vunpack.c.h.b16 %v1014
    %v1454 = vunpack.c.l.b16 %v1015
    %v1455 = vunpack.c.h.b16 %v1015
    %v1456 = vunpack.c.l.b16 %v1016
    %v1457 = vunpack.c.l.b16 %v1017
    %v1458 = vunpack.c.h.b16 %v1017
    %v1459 = vunpack.c.l.b16 %v1018
    %v1460 = vunpack.c.h.b16 %v1018
    %v1461 = vunpack.c.l.b16 %v1019
    %v1462 = vunpack.c.h.b16 %v1019
    %v1463 = vunpack.c.l.b16 %v1020
    %v1464 = vunpack.c.l.b16 %v1021
    %v1465 = vunpack.c.h.b16 %v1021
    %v1466 = vunpack.c.l.b16 %v1022
    %v1467 = vunpack.c.h.b16 %v1022
    %v1468 = vunpack.c.l.b16 %v1023
    %v1469 = vunpack.c.h.b16 %v1023
    %v1470 = vunpack.c.l.b16 %v1024
    %v1471 = vunpack.c.l.b16 %v1025
    %v1472 = vunpack.c.h.b16 %v1025
    %v1473 = vunpack.c.l.b16 %v1026
    %v1474 = vunpack.c.h.b16 %v1026
    %v1475 = vunpack.c.l.b16 %v1027
    %v1476 = vunpack.c.h.b16 %v1027
    %v1477 = vunpack.c.l.b16 %v1028
    %v1478 = vunpack.c.l.b16 %v1029
    %v1479 = vunpack.c.h.b16 %v1029
    %v1480 = vunpack.c.l.b16 %v1030
    %v1481 = vunpack.c.h.b16 %v1030
    %v1482 = vunpack.c.l.b16 %v1031
    %v1483 = vunpack.c.h.b16 %v1031
    %v1484 = vunpack.c.l.b16 %v1032
    %v1485 = vunpack.c.l.b16 %v1033
    %v1486 = vunpack.c.h.b16 %v1033
    %v1487 = vunpack.c.l.b16 %v1034
    %v1488 = vunpack.c.h.b16 %v1034
    %v1489 = vunpack.c.l.b16 %v1035
    %v1490 = vunpack.c.h.b16 %v1035
    %v1491 = vunpack.c.l.b16 %v1036
    %v1492 = vunpack.c.l.b16 %v1037
    %v1493 = vunpack.c.h.b16 %v1037
    %v1494 = vunpack.c.l.b16 %v1038
    %v1495 = vunpack.c.h.b16 %v1038
    %v1496 = vunpack.c.l.b16 %v1039
    %v1497 = vunpack.c.h.b16 %v1039
    %v1498 = vunpack.c.l.b16 %v1040
    %v1499 = vunpack.c.l.b16 %v1041
    %v1500 = vunpack.c.h.b16 %v1041
    %v1501 = vunpack.c.l.b16 %v1042
    %v1502 = vunpack.c.h.b16 %v1042
    %v1503 = vunpack.c.l.b16 %v1043
    %v1504 = vunpack.c.h.b16 %v1043
    %v1505 = vunpack.c.l.b16 %v1044
    %v1506 = vunpack.c.l.b16 %v1045
    %v1507 = vunpack.c.h.b16 %v1045
    %v1508 = vunpack.c.l.b16 %v1046
    %v1509 = vunpack.c.h.b16 %v1046
    %v1510 = vunpack.c.l.b16 %v1047
    %v1511 = vunpack.c.h.b16 %v1047
    %v1512 = vunpack.c.l.b16 %v1048
    %v1513 = vunpack.c.l.b16 %v1049
    %v1514 = vunpack.c.h.b16 %v1049
    %v1515 = vunpack.c.l.b16 %v1050
    %v1516 = vunpack.c.h.b16 %v1050
    %v1517 = vunpack.c.l.b16 %v1051
    %v1518 = vunpack.c.h.b16 %v1051
    %v1519 = vunpack.c.l.b16 %v1052
    %v1520 = vunpack.c.l.b16 %v1053
    %v1521 = vunpack.c.h.b16 %v1053
    %v1522 = vunpack.c.l.b16 %v1054
    %v1523 = vunpack.c.h.b16 %v1054
    %v1524 = vunpack.c.l.b16 %v1055
    %v1525 = vunpack.c.h.b16 %v1055
    %v1526 = vunpack.c.l.b16 %v1056
    %v1527 = vunpack.c.l.b16 %v1057
    %v1528 = vunpack.c.h.b16 %v1057
    %v1529 = vunpack.c.l.b16 %v1058
    %v1530 = vunpack.c.h.b16 %v1058
    %v1531 = vunpack.c.l.b16 %v1059
    %v1532 = vunpack.c.h.b16 %v1059
    %v1533 = vunpack.c.l.b16 %v1060
    %v1534 = vunpack.c.l.b16 %v1061
    %v1535 = vunpack.c.h.b16 %v1061
    %v1536 = vunpack.c.l.b16 %v1062
    %v1537 = vunpack.c.h.b16 %v1062
    %v1538 = vunpack.c.l.b16 %v1063
    %v1539 = vunpack.c.h.b16 %v1063
    %v1540 = vunpack.c.l.b16 %v1064
    %v1541 = vunpack.c.l.b16 %v1065
    %v1542 = vunpack.c.h.b16 %v1065
    %v1543 = vunpack.c.l.b16 %v1066
    %v1544 = vunpack.c.h.b16 %v1066
    %v1545 = vunpack.c.l.b16 %v1067
    %v1546 = vunpack.c.h.b16 %v1067
    %v1547 = vunpack.c.l.b16 %v1068
    %v1548 = vunpack.c.l.b16 %v1069
    %v1549 = vunpack.c.h.b16 %v1069
    %v1550 = vunpack.c.l.b16 %v1070
    %v1551 = vunpack.c.h.b16 %v1070
    %v1552 = vunpack.c.l.b16 %v1071
    %v1553 = vunpack.c.h.b16 %v1071
    %v1554 = vunpack.c.l.b16 %v1072
    %v1555 = vunpack.c.l.b16 %v1073
    %v1556 = vunpack.c.h.b16 %v1073
    %v1557 = vunpack.c.l.b16 %v1074
    %v1558 = vunpack.c.h.b16 %v1074
    %v1559 = vunpack.c.l.b16 %v1075
    %v1560 = vunpack.c.h.b16 %v1075
    %v1561 = vunpack.c.l.b16 %v1076
    %v1562 = vunpack.c.l.b16 %v1077
    %v1563 = vunpack.c.h.b16 %v1077
    %v1564 = vunpack.c.l.b16 %v1078
    %v1565 = vunpack.c.h.b16 %v1078
    %v1566 = vunpack.c.l.b16 %v1079
    %v1567 = vunpack.c.h.b16 %v1079
    %v1568 = vunpack.c.l.b16 %v1080
    %v1569 = vunpack.c.l.b16 %v1081
    %v1570 = vunpack.c.h.b16 %v1081
    %v1571 = vunpack.c.l.b16 %v1082
    %v1572 = vunpack.c.h.b16 %v1082
    %v1573 = vunpack.c.l.b16 %v1083
    %v1574 = vunpack.c.h.b16 %v1083
    %v1575 = vunpack.c.l.b16 %v1084
    %v1576 = vunpack.c.l.b16 %v1085
    %v1577 = vunpack.c.h.b16 %v1085
    %v1578 = vunpack.c.l.b16 %v1086
    %v1579 = vunpack.c.h.b16 %v1086
    %v1580 = vunpack.c.l.b16 %v1087
    %v1581 = vunpack.c.h.b16 %v1087
    %v1582 = vunpack.c.l.b16 %v1088
    %v1583 = vunpack.c.l.b16 %v1089
    %v1584 = vunpack.c.h.b16 %v1089
    %v1585 = vunpack.c.l.b16 %v1090
    %v1586 = vunpack.c.h.b16 %v1090
    %v1587 = vunpack.c.l.b16 %v1091
    %v1588 = vunpack.c.h.b16 %v1091
    %v1589 = vunpack.c.l.b16 %v1092
    %v1590 = vunpack.c.l.b16 %v1093
    %v1591 = vunpack.c.h.b16 %v1093
    %v1592 = vunpack.c.l.b16 %v1094
    %v1593 = vunpack.c.h.b16 %v1094
    %v1594 = vunpack.c.l.b16 %v1095
    %v1595 = vunpack.c.h.b16 %v1095
    %v1596 = vunpack.c.l.b16 %v1096
    %v1597 = vunpack.c.l.b16 %v1097
    %v1598 = vunpack.c.h.b16 %v1097
    %v1599 = vunpack.c.l.b16 %v1098
    %v1600 = vunpack.c.h.b16 %v1098
    %v1601 = vunpack.c.l.b16 %v1099
    %v1602 = vunpack.c.h.b16 %v1099
    %v1603 = vunpack.c.l.b16 %v1100
    %v1604 = vunpack.c.l.b16 %v1101
    %v1605 = vunpack.c.h.b16 %v1101
    %v1606 = vunpack.c.l.b16 %v1102
    %v1607 = vunpack.c.h.b16 %v1102
    %v1608 = vunpack.c.l.b16 %v1103
    %v1609 = vunpack.c.h.b16 %v1103
    %v1610 = vunpack.c.l.b16 %v1104
    %v1611 = vunpack.c.l.b16 %v1105
    %v1612 = vunpack.c.h.b16 %v1105
    %v1613 = vunpack.c.l.b16 %v1106
    %v1614 = vunpack.c.h.b16 %v1106
    %v1615 = vunpack.c.l.b16 %v1107
    %v1616 = vunpack.c.h.b16 %v1107
    %v1617 = vunpack.c.l.b16 %v1108
    %v1618 = vunpack.c.l.b16 %v1109
    %v1619 = vunpack.c.h.b16 %v1109
    %v1620 = vunpack.c.l.b16 %v1110
    %v1621 = vunpack.c.h.b16 %v1110
    %v1622 = vunpack.c.l.b16 %v1111
    %v1623 = vunpack.c.h.b16 %v1111
    %v1624 = vunpack.c.l.b16 %v1112
    %v1625 = vunpack.c.l.b16 %v1113
    %v1626 = vunpack.c.h.b16 %v1113
    %v1627 = vunpack.c.l.b16 %v1114
    %v1628 = vunpack.c.h.b16 %v1114
    %v1629 = vunpack.c.l.b16 %v1115
    %v1630 = vunpack.c.h.b16 %v1115
    %v1631 = vunpack.c.l.b16 %v1116
    %v1632 = vunpack.c.l.b16 %v1117
    %v1633 = vunpack.c.h.b16 %v1117
    %v1634 = vunpack.c.l.b16 %v1118
    %v1635 = vunpack.c.h.b16 %v1118
    %v1636 = vunpack.c.l.b16 %v1119
    %v1637 = vunpack.c.h.b16 %v1119
    %v1638 = vunpack.c.l.b16 %v1120
    %v1639 = vunpack.c.l.b16 %v1121
    %v1640 = vunpack.c.h.b16 %v1121
    %v1641 = vunpack.c.l.b16 %v1122
    %v1642 = vunpack.c.h.b16 %v1122
    %v1643 = vunpack.c.l.b16 %v1123
    %v1644 = vunpack.c.h.b16 %v1123
    %v1645 = vunpack.c.l.b16 %v1124
    %v1646 = vunpack.c.l.b16 %v1125
    %v1647 = vunpack.c.h.b16 %v1125
    %v1648 = vunpack.c.l.b16 %v1126
    %v1649 = vunpack.c.h.b16 %v1126
    %v1650 = vunpack.c.l.b16 %v1127
    %v1651 = vunpack.c.h.b16 %v1127
    %v1652 = vunpack.c.l.b16 %v1128
    %v1653 = vunpack.c.l.b16 %v1129
    %v1654 = vunpack.c.h.b16 %v1129
    %v1655 = vunpack.c.l.b16 %v1130
    %v1656 = vunpack.c.h.b16 %v1130
    %v1657 = vunpack.c.l.b16 %v1131
    %v1658 = vunpack.c.h.b16 %v1131
    %v1659 = vunpack.c.l.b16 %v1132
    %v1660 = vunpack.c.l.b16 %v1133
    %v1661 = vunpack.c.h.b16 %v1133
    %v1662 = vunpack.c.l.b16 %v1134
    %v1663 = vunpack.c.h.b16 %v1134
    %v1664 = vunpack.c.l.b16 %v1135
    %v1665 = vunpack.c.h.b16 %v1135
    %v1666 = vunpack.c.l.b16 %v1136
    %v1667 = vunpack.c.l.b16 %v1137
    %v1668 = vunpack.c.h.b16 %v1137
    %v1669 = vunpack.c.l.b16 %v1138
    %v1670 = vunpack.c.h.b16 %v1138
    %v1671 = vunpack.c.l.b16 %v1139
    %v1672 = vunpack.c.h.b16 %v1139
    %v1673 = vunpack.c.l.b16 %v1140
    %v1674 = vunpack.c.l.b16 %v1141
    %v1675 = vunpack.c.h.b16 %v1141
    %v1676 = vunpack.c.l.b16 %v1142
    %v1677 = vunpack.c.h.b16 %v1142
    %v1678 = vunpack.c.l.b16 %v1143
    %v1679 = vunpack.c.h.b16 %v1143
    %v1680 = vunpack.c.l.b16 %v1144
    %v1681 = vunpack.c.l.b16 %v1145
    %v1682 = vunpack.c.h.b16 %v1145
    %v1683 = vunpack.c.l.b16 %v1146
    %v1684 = vunpack.c.h.b16 %v1146
    %v1685 = vunpack.c.l.b16 %v1147
    %v1686 = vunpack.c.h.b16 %v1147
    %v1687 = vunpack.c.l.b16 %v1148
    %v1688 = vunpack.c.l.b16 %v1149
    %v1689 = vunpack.c.h.b16 %v1149
    %v1690 = vunpack.c.l.b16 %v1150
    %v1691 = vunpack.c.h.b16 %v1150
    %v1692 = vunpack.c.l.b16 %v1151
    %v1693 = vunpack.c.h.b16 %v1151
    %v1694 = vunpack.c.l.b16 %v1152
    %v1695 = vunpack.c.l.b16 %v1153
    %v1696 = vunpack.c.h.b16 %v1153
    %v1697 = vunpack.c.l.b16 %v1154
    %v1698 = vunpack.c.h.b16 %v1154
    %v1699 = vunpack.c.l.b16 %v1155
    %v1700 = vunpack.c.h.b16 %v1155
    %v1701 = vunpack.c.l.b16 %v1156
    %v1702 = vunpack.c.l.b16 %v1157
    %v1703 = vunpack.c.h.b16 %v1157
    %v1704 = vunpack.c.l.b16 %v1158
    %v1705 = vunpack.c.h.b16 %v1158
    %v1706 = vunpack.c.l.b16 %v1159
    %v1707 = vunpack.c.h.b16 %v1159
    %v1708 = vunpack.c.l.b16 %v1160
    %v1709 = vunpack.c.l.b16 %v1161
    %v1710 = vunpack.c.h.b16 %v1161
    %v1711 = vunpack.c.l.b16 %v1162
    %v1712 = vunpack.c.h.b16 %v1162
    %v1713 = vunpack.c.l.b16 %v1163
    %v1714 = vunpack.c.h.b16 %v1163
    %v1715 = vunpack.c.l.b16 %v1164
    %v1716 = vunpack.c.l.b16 %v1165
    %v1717 = vunpack.c.h.b16 %v1165
    %v1718 = vunpack.c.l.b16 %v1166
    %v1719 = vunpack.c.h.b16 %v1166
    %v1720 = vunpack.c.l.b16 %v1167
    %v1721 = vunpack.c.h.b16 %v1167
    %v1722 = vunpack.c.l.b16 %v1168
    %v1723 = vunpack.c.l.b16 %v1169
    %v1724 = vunpack.c.h.b16 %v1169
    %v1725 = vunpack.c.l.b16 %v1170
    %v1726 = vunpack.c.h.b16 %v1170
    %v1727 = vunpack.c.l.b16 %v1171
    %v1728 = vunpack.c.h.b16 %v1171
    %v1729 = vunpack.c.l.b16 %v1172
    %v1730 = vunpack.c.l.b16 %v1173
    %v1731 = vunpack.c.h.b16 %v1173
    %v1732 = vunpack.c.l.b16 %v1174
    %v1733 = vunpack.c.h.b16 %v1174
    %v1734 = vunpack.c.l.b16 %v1175
    %v1735 = vunpack.c.h.b16 %v1175
    %v1736 = vunpack.c.l.b16 %v1176
    %v1737 = vunpack.c.l.b16 %v1177
    %v1738 = vunpack.c.h.b16 %v1177
    %v1739 = vunpack.c.l.b16 %v1178
    %v1740 = vunpack.c.h.b16 %v1178
    %v1741 = vunpack.c.l.b16 %v1179
    %v1742 = vunpack.c.h.b16 %v1179
    %v1743 = vunpack.c.l.b16 %v1180
    %v1744 = vunpack.c.l.b16 %v1181
    %v1745 = vunpack.c.h.b16 %v1181
    %v1746 = vunpack.c.l.b16 %v1182
    %v1747 = vunpack.c.h.b16 %v1182
    %v1748 = vunpack.c.l.b16 %v1183
    %v1749 = vunpack.c.h.b16 %v1183
    %v1750 = vunpack.c.l.b16 %v1184
    %v1751 = vunpack.c.l.b16 %v1185
    %v1752 = vunpack.c.h.b16 %v1185
    %v1753 = vunpack.c.l.b16 %v1186
    %v1754 = vunpack.c.h.b16 %v1186
    %v1755 = vunpack.c.l.b16 %v1187
    %v1756 = vunpack.c.h.b16 %v1187
    %v1757 = vunpack.c.l.b16 %v1188
    %v1758 = vunpack.c.l.b16 %v1189
    %v1759 = vunpack.c.h.b16 %v1189
    %v1760 = vunpack.c.l.b16 %v1190
    %v1761 = vunpack.c.h.b16 %v1190
    %v1762 = vunpack.c.l.b16 %v1191
    %v1763 = vunpack.c.h.b16 %v1191
    %v1764 = vunpack.c.l.b16 %v1192
    %v1765 = vunpack.c.l.b16 %v1193
    %v1766 = vunpack.c.h.b16 %v1193
    %v1767 = vunpack.c.l.b16 %v1194
    %v1768 = vunpack.c.h.b16 %v1194
    %v1769 = vunpack.c.l.b16 %v1195
    %v1770 = vunpack.c.h.b16 %v1195
    %v1771 = vunpack.c.l.b16 %v1196
    %v1772 = vpack.c.b16 %v1436, %v1429
    %v1773 = vpack.c.b16 %v1437, %v1430
    %v1774 = vpack.c.b16 %v1438, %v1431
    %v1775 = vpack.c.b16 %v1439, %v1432
    %v1776 = vpack.c.b16 %v1440, %v1433
    %v1777 = vpack.c.b16 %v1441, %v1434
    %v1778 = vpack.c.b16 %v1442, %v1435
    %v1779 = vpack.c.b16 %v1450, %v1443
    %v1780 = vpack.c.b16 %v1451, %v1444
    %v1781 = vpack.c.b16 %v1452, %v1445
    %v1782 = vpack.c.b16 %v1453, %v1446
    %v1783 = vpack.c.b16 %v1454, %v1447
    %v1784 = vpack.c.b16 %v1455, %v1448
    %v1785 = vpack.c.b16 %v1456, %v1449
    %v1786 = vpack.c.b16 %v1464, %v1457
    %v1787 = vpack.c.b16 %v1465, %v1458
    %v1788 = vpack.c.b16 %v1466, %v1459
    %v1789 = vpack.c.b16 %v1467, %v1460
    %v1790 = vpack.c.b16 %v1468, %v1461
    %v1791 = vpack.c.b16 %v1469, %v1462
    %v1792 = vpack.c.b16 %v1470, %v1463
    %v1793 = vpack.c.b16 %v1478, %v1471
    %v1794 = vpack.c.b16 %v1479, %v1472
    %v1795 = vpack.c.b16 %v1480, %v1473
    %v1796 = vpack.c.b16 %v1481, %v1474
    %v1797 = vpack.c.b16 %v1482, %v1475
    %v1798 = vpack.c.b16 %v1483, %v1476
    %v1799 = vpack.c.b16 %v1484, %v1477
    %v1800 = vpack.c.b16 %v1492, %v1485
    %v1801 = vpack.c.b16 %v1493, %v1486
    %v1802 = vpack.c.b16 %v1494, %v1487
    %v1803 = vpack.c.b16 %v1495, %v1488
    %v1804 = vpack.c.b16 %v1496, %v1489
    %v1805 = vpack.c.b16 %v1497, %v1490
    %v1806 = vpack.c.b16 %v1498, %v1491
    %v1807 = vpack.c.b16 %v1506, %v1499
    %v1808 = vpack.c.b16 %v1507, %v1500
    %v1809 = vpack.c.b16 %v1508, %v1501
    %v1810 = vpack.c.b16 %v1509, %v1502
    %v1811 = vpack.c.b16 %v1510, %v1503
    %v1812 = vpack.c.b16 %v1511, %v1504
    %v1813 = vpack.c.b16 %v1512, %v1505
    %v1814 = vpack.c.b16 %v1520, %v1513
    %v1815 = vpack.c.b16 %v1521, %v1514
    %v1816 = vpack.c.b16 %v1522, %v1515
    %v1817 = vpack.c.b16 %v1523, %v1516
    %v1818 = vpack.c.b16 %v1524, %v1517
    %v1819 = vpack.c.b16 %v1525, %v1518
    %v1820 = vpack.c.b16 %v1526, %v1519
    %v1821 = vpack.c.b16 %v1534, %v1527
    %v1822 = vpack.c.b16 %v1535, %v1528
    %v1823 = vpack.c.b16 %v1536, %v1529
    %v1824 = vpack.c.b16 %v1537, %v1530
    %v1825 = vpack.c.b16 %v1538, %v1531
    %v1826 = vpack.c.b16 %v1539, %v1532
    %v1827 = vpack.c.b16 %v1540, %v1533
    %v1828 = vpack.c.b16 %v1548, %v1541
    %v1829 = vpack.c.b16 %v1549, %v1542
    %v1830 = vpack.c.b16 %v1550, %v1543
    %v1831 = vpack.c.b16 %v1551, %v1544
    %v1832 = vpack.c.b16 %v1552, %v1545
    %v1833 = vpack.c.b16 %v1553, %v1546
    %v1834 = vpack.c.b16 %v1554, %v1547
    %v1835 = vpack.c.b16 %v1562, %v1555
    %v1836 = vpack.c.b16 %v1563, %v1556
    %v1837 = vpack.c.b16 %v1564, %v1557
    %v1838 = vpack.c.b16 %v1565, %v1558
    %v1839 = vpack.c.b16 %v1566, %v1559
    %v1840 = vpack.c.b16 %v1567, %v1560
    %v1841 = vpack.c.b16 %v1568, %v1561
    %v1842 = vpack.c.b16 %v1576, %v1569
    %v1843 = vpack.c.b16 %v1577, %v1570
    %v1844 = vpack.c.b16 %v1578, %v1571
    %v1845 = vpack.c.b16 %v1579, %v1572
    %v1846 = vpack.c.b16 %v1580, %v1573
    %v1847 = vpack.c.b16 %v1581, %v1574
    %v1848 = vpack.c.b16 %v1582, %v1575
    %v1849 = vpack.c.b16 %v1590, %v1583
    %v1850 = vpack.c.b16 %v1591, %v1584
    %v1851 = vpack.c.b16 %v1592, %v1585
    %v1852 = vpack.c.b16 %v1593, %v1586
    %v1853 = vpack.c.b16 %v1594, %v1587
    %v1854 = vpack.c.b16 %v1595, %v1588
    %v1855 = vpack.c.b16 %v1596, %v1589
    %v1856 = vpack.c.b16 %v1604, %v1597
    %v1857 = vpack.c.b16 %v1605, %v1598
    %v1858 = vpack.c.b16 %v1606, %v1599
    %v1859 = vpack.c.b16 %v1607, %v1600
    %v1860 = vpack.c.b16 %v1608, %v1601
    %v1861 = vpack.c.b16 %v1609, %v1602
    %v1862 = vpack.c.b16 %v1610, %v1603
    %v1863 = vpack.c.b16 %v1618, %v1611
    %v1864 = vpack.c.b16 %v1619, %v1612
    %v1865 = vpack.c.b16 %v1620, %v1613
    %v1866 = vpack.c.b16 %v1621, %v1614
    %v1867 = vpack.c.b16 %v1622, %v1615
    %v1868 = vpack.c.b16 %v1623, %v1616
    %v1869 = vpack.c.b16 %v1624, %v1617
    %v1870 = vpack.c.b16 %v1632, %v1625
    %v1871 = vpack.c.b16 %v1633, %v1626
    %v1872 = vpack.c.b16 %v1634, %v1627
    %v1873 = vpack.c.b16 %v1635, %v1628
    %v1874 = vpack.c.b16 %v1636, %v1629
    %v1875 = vpack.c.b16 %v1637, %v1630
    %v1876 = vpack.c.b16 %v1638, %v1631
    %v1877 = vpack.c.b16 %v1646, %v1639
    %v1878 = vpack.c.b16 %v1647, %v1640
    %v1879 = vpack.c.b16 %v1648, %v1641
    %v1880 = vpack.c.b16 %v1649, %v1642
    %v1881 = vpack.c.b16 %v1650, %v1643
    %v1882 = vpack.c.b16 %v1651, %v1644
    %v1883 = vpack.c.b16 %v1652, %v1645
    %v1884 = vpack.c.b16 %v1660, %v1653
    %v1885 = vpack.c.b16 %v1661, %v1654
    %v1886 = vpack.c.b16 %v1662, %v1655
    %v1887 = vpack.c.b16 %v1663, %v1656
    %v1888 = vpack.c.b16 %v1664, %v1657
    %v1889 = vpack.c.b16 %v1665, %v1658
    %v1890 = vpack.c.b16 %v1666, %v1659
    %v1891 = vpack.c.b16 %v1674, %v1667
    %v1892 = vpack.c.b16 %v1675, %v1668
    %v1893 = vpack.c.b16 %v1676, %v1669
    %v1894 = vpack.c.b16 %v1677, %v1670
    %v1895 = vpack.c.b16 %v1678, %v1671
    %v1896 = vpack.c.b16 %v1679, %v1672
    %v1897 = vpack.c.b16 %v1680, %v1673
    %v1898 = vpack.c.b16 %v1688, %v1681
    %v1899 = vpack.c.b16 %v1689, %v1682
    %v1900 = vpack.c.b16 %v1690, %v1683
    %v1901 = vpack.c.b16 %v1691, %v1684
    %v1902 = vpack.c.b16 %v1692, %v1685
    %v1903 = vpack.c.b16 %v1693, %v1686
    %v1904 = vpack.c.b16 %v1694, %v1687
    %v1905 = vpack.c.b16 %v1702, %v1695
    %v1906 = vpack.c.b16 %v1703, %v1696
    %v1907 = vpack.c.b16 %v1704, %v1697
    %v1908 = vpack.c.b16 %v1705, %v1698
    %v1909 = vpack.c.b16 %v1706, %v1699
    %v1910 = vpack.c.b16 %v1707, %v1700
    %v1911 = vpack.c.b16 %v1708, %v1701
    %v1912 = vpack.c.b16 %v1716, %v1709
    %v1913 = vpack.c.b16 %v1717, %v1710
    %v1914 = vpack.c.b16 %v1718, %v1711
    %v1915 = vpack.c.b16 %v1719, %v1712
    %v1916 = vpack.c.b16 %v1720, %v1713
    %v1917 = vpack.c.b16 %v1721, %v1714
    %v1918 = vpack.c.b16 %v1722, %v1715
    %v1919 = vpack.c.b16 %v1730, %v1723
    %v1920 = vpack.c.b16 %v1731, %v1724
    %v1921 = vpack.c.b16 %v1732, %v1725
    %v1922 = vpack.c.b16 %v1733, %v1726
    %v1923 = vpack.c.b16 %v1734, %v1727
    %v1924 = vpack.c.b16 %v1735, %v1728
    %v1925 = vpack.c.b16 %v1736, %v1729
    %v1926 = vpack.c.b16 %v1744, %v1737
    %v1927 = vpack.c.b16 %v1745, %v1738
    %v1928 = vpack.c.b16 %v1746, %v1739
    %v1929 = vpack.c.b16 %v1747, %v1740
    %v1930 = vpack.c.b16 %v1748, %v1741
    %v1931 = vpack.c.b16 %v1749, %v1742
    %v1932 = vpack.c.b16 %v1750, %v1743
    %v1933 = vpack.c.b16 %v1758, %v1751
    %v1934 = vpack.c.b16 %v1759, %v1752
    %v1935 = vpack.c.b16 %v1760, %v1753
    %v1936 = vpack.c.b16 %v1761, %v1754
    %v1937 = vpack.c.b16 %v1762, %v1755
    %v1938 = vpack.c.b16 %v1763, %v1756
    %v1939 = vpack.c.b16 %v1764, %v1757
    %v1940 = vpack.c.b16 %v1765, %v1765
    %v1941 = vpack.c.b16 %v1766, %v1766
    %v1942 = vpack.c.b16 %v1767, %v1767
    %v1943 = vpack.c.b16 %v1768, %v1768
    %v1944 = vpack.c.b16 %v1769, %v1769
    %v1945 = vpack.c.b16 %v1770, %v1770
    %v1946 = vpack.c.b16 %v1771, %v1771
    %v2116 = vsel %vm814, %v1000, 0
    %vm2118 = vcmask 1043456
    %v2120 = vsel %vm2118, %v1940, 0
    %v2123 = vsel %vm2118, %v1941, 0
    %v2126 = vsel %vm2118, %v1942, 0
    %v2129 = vsel %vm2118, %v1943, 0
    %v2132 = vsel %vm2118, %v1944, 0
    %v2135 = vsel %vm2118, %v1945, 0
    %v2138 = vsel %vm2118, %v1946, 0
    %2140 = vmatprep.subr.bf16.mxu0 %v1822
    %2141 = vmatpush1.bf16.msra.mxu0 %v1821
    %2142 = vmatprep.subr.bf16.mxu0 %v1815
    %2143 = vmatpush1.bf16.msra.mxu0 %v1814
    %2144 = vmatprep.subr.bf16.mxu0 %v1808
    %2145 = vmatpush1.bf16.msra.mxu0 %v1807
    %2146 = vmatprep.subr.bf16.mxu0 %v1801
    %2147 = vmatpush1.bf16.msra.mxu0 %v1800
    %2148 = vmatprep.subr.bf16.mxu0 %v1794
    %2149 = vmatpush1.bf16.msra.mxu0 %v1793
    %2150 = vmatprep.subr.bf16.mxu0 %v1787
    %2151 = vmatpush1.bf16.msra.mxu0 %v1786
    %2152 = vmatprep.subr.bf16.mxu0 %v1780
    %2153 = vmatpush1.bf16.msra.mxu0 %v1779
    %2154 = vmatprep.subr.bf16.mxu0 %v1773
    %2155 = vmatpush1.bf16.msra.mxu0 %v1772
    %2156 = vmatprep.subr.bf16.mxu0 %v1878
    %2157 = vmatpush2.bf16.msra.mxu0 %v1877
    %2158 = vmatprep.subr.bf16.mxu0 %v1871
    %2159 = vmatpush2.bf16.msra.mxu0 %v1870
    %2160 = vmatprep.subr.bf16.mxu0 %v1864
    %2161 = vmatpush2.bf16.msra.mxu0 %v1863
    %2162 = vmatprep.subr.bf16.mxu0 %v1857
    %2163 = vmatpush2.bf16.msra.mxu0 %v1856
    %2164 = vmatprep.subr.bf16.mxu0 %v1850
    %2165 = vmatpush2.bf16.msra.mxu0 %v1849
    %2166 = vmatprep.subr.bf16.mxu0 %v1843
    %2167 = vmatpush2.bf16.msra.mxu0 %v1842
    %2168 = vmatprep.subr.bf16.mxu0 %v1836
    %2169 = vmatpush2.bf16.msra.mxu0 %v1835
    %2170 = vmatprep.subr.bf16.mxu0 %v1829
    %2171 = vmatpush2.bf16.msra.mxu0 %v1828
    %2172 = vmatprep.mubr.bf16.mxu0 %v998
    %2173 = vmatmul.mubr.bf16.gmra.mxu0 %v997
    %v2174 = vpop.f32.mrf.mxu0
    %v2175 = vadd.f32 %v1201, %v2174
    %v2176 = vpop.f32.mrf.mxu0
    %v2177 = vadd.f32 %v1205, %v2176
    %v2178 = vpop.f32.mrf.mxu0
    %v2179 = vpop.f32.mrf.mxu0
    %2180 = vdwg.mxu0
    %2181 = vmatprep.subr.bf16.mxu0 %v1934
    %2182 = vmatpush1.bf16.msra.mxu0 %v1933
    %2183 = vmatprep.subr.bf16.mxu0 %v1927
    %2184 = vmatpush1.bf16.msra.mxu0 %v1926
    %2185 = vmatprep.subr.bf16.mxu0 %v1920
    %2186 = vmatpush1.bf16.msra.mxu0 %v1919
    %2187 = vmatprep.subr.bf16.mxu0 %v1913
    %2188 = vmatpush1.bf16.msra.mxu0 %v1912
    %2189 = vmatprep.subr.bf16.mxu0 %v1906
    %2190 = vmatpush1.bf16.msra.mxu0 %v1905
    %2191 = vmatprep.subr.bf16.mxu0 %v1899
    %2192 = vmatpush1.bf16.msra.mxu0 %v1898
    %2193 = vmatprep.subr.bf16.mxu0 %v1892
    %2194 = vmatpush1.bf16.msra.mxu0 %v1891
    %2195 = vmatprep.subr.bf16.mxu0 %v1885
    %2196 = vmatpush1.bf16.msra.mxu0 %v1884
    %2197 = vmatprep.subr.bf16.mxu0 0
    %2198 = vmatpush2.bf16.msra.mxu0 0
    %2199 = vmatprep.subr.bf16.mxu0 0
    %2200 = vmatpush2.bf16.msra.mxu0 0
    %2201 = vmatprep.subr.bf16.mxu0 0
    %2202 = vmatpush2.bf16.msra.mxu0 0
    %2203 = vmatprep.subr.bf16.mxu0 0
    %2204 = vmatpush2.bf16.msra.mxu0 0
    %2205 = vmatprep.subr.bf16.mxu0 0
    %2206 = vmatpush2.bf16.msra.mxu0 0
    %2207 = vmatprep.subr.bf16.mxu0 0
    %2208 = vmatpush2.bf16.msra.mxu0 0
    %2209 = vmatprep.subr.bf16.mxu0 0
    %2210 = vmatpush2.bf16.msra.mxu0 0
    %2211 = vmatprep.subr.bf16.mxu0 %v2123
    %2212 = vmatpush2.bf16.msra.mxu0 %v2120
    %2213 = vmatprep.mubr.bf16.mxu0 %v2116
    %2214 = vmatmul.mubr.bf16.gmra.mxu0 %v999
    %v2215 = vpop.f32.mrf.mxu0
    %v2216 = vadd.f32 %v2175, %v2215
    %v2217 = vpop.f32.mrf.mxu0
    %v2218 = vadd.f32 %v2177, %v2217
    %v2219 = vpop.f32.mrf.mxu0
    %v2220 = vpop.f32.mrf.mxu0
    %2221 = vdwg.mxu0
    %2222 = vmatprep.subr.bf16.mxu0 %v1824
    %2223 = vmatpush1.bf16.msra.mxu0 %v1823
    %2224 = vmatprep.subr.bf16.mxu0 %v1817
    %2225 = vmatpush1.bf16.msra.mxu0 %v1816
    %2226 = vmatprep.subr.bf16.mxu0 %v1810
    %2227 = vmatpush1.bf16.msra.mxu0 %v1809
    %2228 = vmatprep.subr.bf16.mxu0 %v1803
    %2229 = vmatpush1.bf16.msra.mxu0 %v1802
    %2230 = vmatprep.subr.bf16.mxu0 %v1796
    %2231 = vmatpush1.bf16.msra.mxu0 %v1795
    %2232 = vmatprep.subr.bf16.mxu0 %v1789
    %2233 = vmatpush1.bf16.msra.mxu0 %v1788
    %2234 = vmatprep.subr.bf16.mxu0 %v1782
    %2235 = vmatpush1.bf16.msra.mxu0 %v1781
    %2236 = vmatprep.subr.bf16.mxu0 %v1775
    %2237 = vmatpush1.bf16.msra.mxu0 %v1774
    %2238 = vmatprep.subr.bf16.mxu0 %v1880
    %2239 = vmatpush2.bf16.msra.mxu0 %v1879
    %2240 = vmatprep.subr.bf16.mxu0 %v1873
    %2241 = vmatpush2.bf16.msra.mxu0 %v1872
    %2242 = vmatprep.subr.bf16.mxu0 %v1866
    %2243 = vmatpush2.bf16.msra.mxu0 %v1865
    %2244 = vmatprep.subr.bf16.mxu0 %v1859
    %2245 = vmatpush2.bf16.msra.mxu0 %v1858
    %2246 = vmatprep.subr.bf16.mxu0 %v1852
    %2247 = vmatpush2.bf16.msra.mxu0 %v1851
    %2248 = vmatprep.subr.bf16.mxu0 %v1845
    %2249 = vmatpush2.bf16.msra.mxu0 %v1844
    %2250 = vmatprep.subr.bf16.mxu0 %v1838
    %2251 = vmatpush2.bf16.msra.mxu0 %v1837
    %2252 = vmatprep.subr.bf16.mxu0 %v1831
    %2253 = vmatpush2.bf16.msra.mxu0 %v1830
    %2254 = vmatprep.mubr.bf16.mxu0 %v998
    %2255 = vmatmul.mubr.bf16.gmra.mxu0 %v997
    %v2256 = vpop.f32.mrf.mxu0
    %v2257 = vadd.f32 %v1209, %v2256
    %v2258 = vpop.f32.mrf.mxu0
    %v2259 = vadd.f32 %v1213, %v2258
    %v2260 = vpop.f32.mrf.mxu0
    %v2261 = vpop.f32.mrf.mxu0
    %2262 = vdwg.mxu0
    %2263 = vmatprep.subr.bf16.mxu0 %v1936
    %2264 = vmatpush1.bf16.msra.mxu0 %v1935
    %2265 = vmatprep.subr.bf16.mxu0 %v1929
    %2266 = vmatpush1.bf16.msra.mxu0 %v1928
    %2267 = vmatprep.subr.bf16.mxu0 %v1922
    %2268 = vmatpush1.bf16.msra.mxu0 %v1921
    %2269 = vmatprep.subr.bf16.mxu0 %v1915
    %2270 = vmatpush1.bf16.msra.mxu0 %v1914
    %2271 = vmatprep.subr.bf16.mxu0 %v1908
    %2272 = vmatpush1.bf16.msra.mxu0 %v1907
    %2273 = vmatprep.subr.bf16.mxu0 %v1901
    %2274 = vmatpush1.bf16.msra.mxu0 %v1900
    %2275 = vmatprep.subr.bf16.mxu0 %v1894
    %2276 = vmatpush1.bf16.msra.mxu0 %v1893
    %2277 = vmatprep.subr.bf16.mxu0 %v1887
    %2278 = vmatpush1.bf16.msra.mxu0 %v1886
    %2279 = vmatprep.subr.bf16.mxu0 0
    %2280 = vmatpush2.bf16.msra.mxu0 0
    %2281 = vmatprep.subr.bf16.mxu0 0
    %2282 = vmatpush2.bf16.msra.mxu0 0
    %2283 = vmatprep.subr.bf16.mxu0 0
    %2284 = vmatpush2.bf16.msra.mxu0 0
    %2285 = vmatprep.subr.bf16.mxu0 0
    %2286 = vmatpush2.bf16.msra.mxu0 0
    %2287 = vmatprep.subr.bf16.mxu0 0
    %2288 = vmatpush2.bf16.msra.mxu0 0
    %2289 = vmatprep.subr.bf16.mxu0 0
    %2290 = vmatpush2.bf16.msra.mxu0 0
    %2291 = vmatprep.subr.bf16.mxu0 0
    %2292 = vmatpush2.bf16.msra.mxu0 0
    %2293 = vmatprep.subr.bf16.mxu0 %v2129
    %2294 = vmatpush2.bf16.msra.mxu0 %v2126
    %2295 = vmatprep.mubr.bf16.mxu0 %v2116
    %2296 = vmatmul.mubr.bf16.gmra.mxu0 %v999
    %v2297 = vpop.f32.mrf.mxu0
    %v2298 = vadd.f32 %v2257, %v2297
    %v2299 = vpop.f32.mrf.mxu0
    %v2300 = vadd.f32 %v2259, %v2299
    %v2301 = vpop.f32.mrf.mxu0
    %v2302 = vpop.f32.mrf.mxu0
    %2303 = vdwg.mxu0
    %2304 = vmatprep.subr.bf16.mxu0 %v1826
    %2305 = vmatpush1.bf16.msra.mxu0 %v1825
    %2306 = vmatprep.subr.bf16.mxu0 %v1819
    %2307 = vmatpush1.bf16.msra.mxu0 %v1818
    %2308 = vmatprep.subr.bf16.mxu0 %v1812
    %2309 = vmatpush1.bf16.msra.mxu0 %v1811
    %2310 = vmatprep.subr.bf16.mxu0 %v1805
    %2311 = vmatpush1.bf16.msra.mxu0 %v1804
    %2312 = vmatprep.subr.bf16.mxu0 %v1798
    %2313 = vmatpush1.bf16.msra.mxu0 %v1797
    %2314 = vmatprep.subr.bf16.mxu0 %v1791
    %2315 = vmatpush1.bf16.msra.mxu0 %v1790
    %2316 = vmatprep.subr.bf16.mxu0 %v1784
    %2317 = vmatpush1.bf16.msra.mxu0 %v1783
    %2318 = vmatprep.subr.bf16.mxu0 %v1777
    %2319 = vmatpush1.bf16.msra.mxu0 %v1776
    %2320 = vmatprep.subr.bf16.mxu0 %v1882
    %2321 = vmatpush2.bf16.msra.mxu0 %v1881
    %2322 = vmatprep.subr.bf16.mxu0 %v1875
    %2323 = vmatpush2.bf16.msra.mxu0 %v1874
    %2324 = vmatprep.subr.bf16.mxu0 %v1868
    %2325 = vmatpush2.bf16.msra.mxu0 %v1867
    %2326 = vmatprep.subr.bf16.mxu0 %v1861
    %2327 = vmatpush2.bf16.msra.mxu0 %v1860
    %2328 = vmatprep.subr.bf16.mxu0 %v1854
    %2329 = vmatpush2.bf16.msra.mxu0 %v1853
    %2330 = vmatprep.subr.bf16.mxu0 %v1847
    %2331 = vmatpush2.bf16.msra.mxu0 %v1846
    %2332 = vmatprep.subr.bf16.mxu0 %v1840
    %2333 = vmatpush2.bf16.msra.mxu0 %v1839
    %2334 = vmatprep.subr.bf16.mxu0 %v1833
    %2335 = vmatpush2.bf16.msra.mxu0 %v1832
    %2336 = vmatprep.mubr.bf16.mxu0 %v998
    %2337 = vmatmul.mubr.bf16.gmra.mxu0 %v997
    %v2338 = vpop.f32.mrf.mxu0
    %v2339 = vadd.f32 %v1217, %v2338
    %v2340 = vpop.f32.mrf.mxu0
    %v2341 = vadd.f32 %v1221, %v2340
    %v2342 = vpop.f32.mrf.mxu0
    %v2343 = vpop.f32.mrf.mxu0
    %2344 = vdwg.mxu0
    %2345 = vmatprep.subr.bf16.mxu0 %v1938
    %2346 = vmatpush1.bf16.msra.mxu0 %v1937
    %2347 = vmatprep.subr.bf16.mxu0 %v1931
    %2348 = vmatpush1.bf16.msra.mxu0 %v1930
    %2349 = vmatprep.subr.bf16.mxu0 %v1924
    %2350 = vmatpush1.bf16.msra.mxu0 %v1923
    %2351 = vmatprep.subr.bf16.mxu0 %v1917
    %2352 = vmatpush1.bf16.msra.mxu0 %v1916
    %2353 = vmatprep.subr.bf16.mxu0 %v1910
    %2354 = vmatpush1.bf16.msra.mxu0 %v1909
    %2355 = vmatprep.subr.bf16.mxu0 %v1903
    %2356 = vmatpush1.bf16.msra.mxu0 %v1902
    %2357 = vmatprep.subr.bf16.mxu0 %v1896
    %2358 = vmatpush1.bf16.msra.mxu0 %v1895
    %2359 = vmatprep.subr.bf16.mxu0 %v1889
    %2360 = vmatpush1.bf16.msra.mxu0 %v1888
    %2361 = vmatprep.subr.bf16.mxu0 0
    %2362 = vmatpush2.bf16.msra.mxu0 0
    %2363 = vmatprep.subr.bf16.mxu0 0
    %2364 = vmatpush2.bf16.msra.mxu0 0
    %2365 = vmatprep.subr.bf16.mxu0 0
    %2366 = vmatpush2.bf16.msra.mxu0 0
    %2367 = vmatprep.subr.bf16.mxu0 0
    %2368 = vmatpush2.bf16.msra.mxu0 0
    %2369 = vmatprep.subr.bf16.mxu0 0
    %2370 = vmatpush2.bf16.msra.mxu0 0
    %2371 = vmatprep.subr.bf16.mxu0 0
    %2372 = vmatpush2.bf16.msra.mxu0 0
    %2373 = vmatprep.subr.bf16.mxu0 0
    %2374 = vmatpush2.bf16.msra.mxu0 0
    %2375 = vmatprep.subr.bf16.mxu0 %v2135
    %2376 = vmatpush2.bf16.msra.mxu0 %v2132
    %2377 = vmatprep.mubr.bf16.mxu0 %v2116
    %2378 = vmatmul.mubr.bf16.gmra.mxu0 %v999
    %v2379 = vpop.f32.mrf.mxu0
    %v2380 = vadd.f32 %v2339, %v2379
    %v2381 = vpop.f32.mrf.mxu0
    %v2382 = vadd.f32 %v2341, %v2381
    %v2383 = vpop.f32.mrf.mxu0
    %v2384 = vpop.f32.mrf.mxu0
    %2385 = vdwg.mxu0
    %2386 = vmatprep.subr.bf16.mxu0 0
    %2387 = vmatpush1.bf16.msra.mxu0 %v1827
    %2388 = vmatprep.subr.bf16.mxu0 0
    %2389 = vmatpush1.bf16.msra.mxu0 %v1820
    %2390 = vmatprep.subr.bf16.mxu0 0
    %2391 = vmatpush1.bf16.msra.mxu0 %v1813
    %2392 = vmatprep.subr.bf16.mxu0 0
    %2393 = vmatpush1.bf16.msra.mxu0 %v1806
    %2394 = vmatprep.subr.bf16.mxu0 0
    %2395 = vmatpush1.bf16.msra.mxu0 %v1799
    %2396 = vmatprep.subr.bf16.mxu0 0
    %2397 = vmatpush1.bf16.msra.mxu0 %v1792
    %2398 = vmatprep.subr.bf16.mxu0 0
    %2399 = vmatpush1.bf16.msra.mxu0 %v1785
    %2400 = vmatprep.subr.bf16.mxu0 0
    %2401 = vmatpush1.bf16.msra.mxu0 %v1778
    %2402 = vmatprep.subr.bf16.mxu0 0
    %2403 = vmatpush2.bf16.msra.mxu0 %v1883
    %2404 = vmatprep.subr.bf16.mxu0 0
    %2405 = vmatpush2.bf16.msra.mxu0 %v1876
    %2406 = vmatprep.subr.bf16.mxu0 0
    %2407 = vmatpush2.bf16.msra.mxu0 %v1869
    %2408 = vmatprep.subr.bf16.mxu0 0
    %2409 = vmatpush2.bf16.msra.mxu0 %v1862
    %2410 = vmatprep.subr.bf16.mxu0 0
    %2411 = vmatpush2.bf16.msra.mxu0 %v1855
    %2412 = vmatprep.subr.bf16.mxu0 0
    %2413 = vmatpush2.bf16.msra.mxu0 %v1848
    %2414 = vmatprep.subr.bf16.mxu0 0
    %2415 = vmatpush2.bf16.msra.mxu0 %v1841
    %2416 = vmatprep.subr.bf16.mxu0 0
    %2417 = vmatpush2.bf16.msra.mxu0 %v1834
    %2418 = vmatprep.mubr.bf16.mxu0 %v998
    %2419 = vmatmul.mubr.bf16.gmra.mxu0 %v997
    %v2420 = vpop.f32.mrf.mxu0
    %v2421 = vadd.f32 %v1225, %v2420
    %v2422 = vpop.f32.mrf.mxu0
    %v2423 = vpop.f32.mrf.mxu0
    %v2424 = vpop.f32.mrf.mxu0
    %2425 = vdwg.mxu0
    %2426 = vmatprep.subr.bf16.mxu0 0
    %2427 = vmatpush1.bf16.msra.mxu0 %v1939
    %2428 = vmatprep.subr.bf16.mxu0 0
    %2429 = vmatpush1.bf16.msra.mxu0 %v1932
    %2430 = vmatprep.subr.bf16.mxu0 0
    %2431 = vmatpush1.bf16.msra.mxu0 %v1925
    %2432 = vmatprep.subr.bf16.mxu0 0
    %2433 = vmatpush1.bf16.msra.mxu0 %v1918
    %2434 = vmatprep.subr.bf16.mxu0 0
    %2435 = vmatpush1.bf16.msra.mxu0 %v1911
    %2436 = vmatprep.subr.bf16.mxu0 0
    %2437 = vmatpush1.bf16.msra.mxu0 %v1904
    %2438 = vmatprep.subr.bf16.mxu0 0
    %2439 = vmatpush1.bf16.msra.mxu0 %v1897
    %2440 = vmatprep.subr.bf16.mxu0 0
    %2441 = vmatpush1.bf16.msra.mxu0 %v1890
    %2442 = vmatprep.subr.bf16.mxu0 0
    %2443 = vmatpush2.bf16.msra.mxu0 0
    %2444 = vmatprep.subr.bf16.mxu0 0
    %2445 = vmatpush2.bf16.msra.mxu0 0
    %2446 = vmatprep.subr.bf16.mxu0 0
    %2447 = vmatpush2.bf16.msra.mxu0 0
    %2448 = vmatprep.subr.bf16.mxu0 0
    %2449 = vmatpush2.bf16.msra.mxu0 0
    %2450 = vmatprep.subr.bf16.mxu0 0
    %2451 = vmatpush2.bf16.msra.mxu0 0
    %2452 = vmatprep.subr.bf16.mxu0 0
    %2453 = vmatpush2.bf16.msra.mxu0 0
    %2454 = vmatprep.subr.bf16.mxu0 0
    %2455 = vmatpush2.bf16.msra.mxu0 0
    %2456 = vmatprep.subr.bf16.mxu0 0
    %2457 = vmatpush2.bf16.msra.mxu0 %v2138
    %2458 = vmatprep.mubr.bf16.mxu0 %v2116
    %2459 = vmatmul.mubr.bf16.gmra.mxu0 %v999
    %v2460 = vpop.f32.mrf.mxu0
    %v2461 = vadd.f32 %v2421, %v2460
    %v2462 = vpop.f32.mrf.mxu0
    %v2463 = vpop.f32.mrf.mxu0
    %v2464 = vpop.f32.mrf.mxu0
    %2465 = vdwg.mxu0
    %v2466 = vtanh.pop %v2216
    %v2467 = vtanh.pop %v2218
    %v2468 = vtanh.pop %v2298
    %v2469 = vtanh.pop %v2300
    %v2470 = vtanh.pop %v2380
    %v2471 = vtanh.pop %v2382
    %v2472 = vtanh.pop %v2461
    %2473 = vst [vmem:[#allocation5] sm:$0xff] %v2466
    %2474 = vst [vmem:[#allocation5 + $0x8] sm:$0xff] %v2467
    %2475 = vst [vmem:[#allocation5 + $0x10] sm:$0xff] %v2468
    %2476 = vst [vmem:[#allocation5 + $0x18] sm:$0xff] %v2469
    %2477 = vst [vmem:[#allocation5 + $0x20] sm:$0xff] %v2470
    %2478 = vst [vmem:[#allocation5 + $0x28] sm:$0xff] %v2471
    %vm2479 = vcmask 130048
    %2480 = vst.msk [vmem:[#allocation5 + $0x30] sm:$0xff] %vm2479, %v2472
    // Predicated region
    $region30: #{tpu_custom_call.1} parent=1 // pred_check
      _
    $region31: #{tpu_custom_call.1} parent=1 // pred_check_branch
      %2482 = sbr.rel (0) target = $region33
    $region32: #{tpu_custom_call.1} parent=1 // pred_region
      %s2484 = ssub.s32 896, 896
      %2485 = vsyncadd [#allocation4], %s2484
      %s2487 = sshll.u32 [#allocation5], 4
      %s2488 = int_to_ptr.vmem [resolvable:$true] %s2487
      %2490 = dma.vmem_to_hbm [thread:$0]  %s2488, 896, %s6, [#allocation4]
    $region33: #{tpu_custom_call.1} parent=1 // pred_fallthru
      _
    // Predicated region
    $region34: #{tpu_custom_call.1} parent=1 // pred_check
      _
    $region35: #{tpu_custom_call.1} parent=1 // pred_check_branch
      %2492 = sbr.rel (0) target = $region37
    $region36: #{tpu_custom_call.1} parent=1 // pred_region
      %2493 = dma.done [#allocation4], 896
    $region37: #{tpu_custom_call.1} parent=1 // pred_fallthru
      _
    %2494 = vsyncpa [#allocation3], 1
    %2495 = vsyncpa [#allocation4], 1

</llo_original>
